<compile_context>
chip_gen: v5e
topology: v5e:2x2
jax: 0.10.0
libtpu: 0.0.40
codegen_flags: <defaults>
</compile_context>

<pallas_src>
import functools
import re

import jax
import jax.numpy as jnp
from jax.experimental import pallas as pl
from jax.experimental.pallas import tpu as pltpu


def _round_up(x: int, m: int) -> int:
    return (x + m - 1) // m * m


def _chip_config():
    """Generation-dependent tiling / VMEM policy (conservative on unknown HW)."""
    kind = ""
    try:
        kind = jax.devices()[0].device_kind.lower()
    except Exception:
        pass
    m = re.search(r"(\d+)", kind)
    gen = int(m.group(1)) if m else 0
    if gen in (4, 5, 6):
        # 128 MiB physical VMEM generations: use most of it.
        return dict(vmem_limit=112 * 2**20, vmem_budget=98 * 2**20,
                    tm_prefill=1024, tn_prefill=512, tn_decode=2048)
    if gen >= 7:
        # v7x: 64 MiB physical VMEM per TensorCore.
        return dict(vmem_limit=56 * 2**20, vmem_budget=50 * 2**20,
                    tm_prefill=512, tn_prefill=512, tn_decode=1024)
    # v2/v3/unknown: very conservative, leave scoped limit at default.
    return dict(vmem_limit=None, vmem_budget=12 * 2**20,
                tm_prefill=256, tn_prefill=256, tn_decode=512)


def _largest_dividing_tile(total: int, want: int) -> int:
    """Largest multiple of 128 <= want that divides total (avoids per-call
    weight padding). Falls back to 128 (caller pads) if none exists."""
    if total <= 128:
        return total
    want = max(128, min(want, total))
    want -= want % 128
    for cand in range(want, 127, -128):
        if total % cand == 0:
            return cand
    return 128


def _vmem_bytes(tm, tn, H, x_b, w_b, o_b, w_bufs):
    return (2 * tm * H * x_b                 # x tile, double buffered
            + w_bufs * 2 * H * tn * w_b      # stacked gate/up weight tile
            + w_bufs * tn * H * w_b          # down weight tile
            + 2 * tm * H * o_b               # output tile, double buffered
            + tm * H * 4)                    # f32 accumulator scratch


def _select_tiles(T, H, I_pad, x_dtype, w_dtype, o_dtype, cfg, tm, tn):
    x_b, w_b, o_b = x_dtype.itemsize, w_dtype.itemsize, o_dtype.itemsize
    decode = T <= 128
    if tm is None:
        tm = 256 if decode else cfg["tm_prefill"]
    if tn is None:
        tn = cfg["tn_decode"] if decode else cfg["tn_prefill"]
    tm = int(max(8, min(_round_up(tm, 8), _round_up(T, 8))))
    tn = int(max(128, min(_round_up(tn, 128), _round_up(I_pad, 128))))
    tn = _largest_dividing_tile(I_pad, tn)
    w_bufs = 3 if decode else 2  # deeper weight pipeline hides DMA at tiny tm

    # Shrink until the footprint fits the per-generation VMEM budget.
    while _vmem_bytes(tm, tn, H, x_b, w_b, o_b, w_bufs) > cfg["vmem_budget"]:
        if w_bufs > 2:
            w_bufs = 2
        elif tn > 256 and tn >= tm:
            tn = _largest_dividing_tile(I_pad, max(128, _round_up(tn // 2, 128)))
        elif tm > 8:
            tm = max(8, _round_up(tm // 2, 8))
        elif tn > 128:
            tn = _largest_dividing_tile(I_pad, max(128, _round_up(tn // 2, 128)))
        else:
            break
    return tm, tn, w_bufs


def qwen_mlp_kernel(x_ref, w_gu_ref, w_down_ref, o_ref, acc_ref):
    # x_ref:      (tm, H)
    # w_gu_ref:   (2, H, tn)   [0] = gate columns, [1] = up columns (this I-tile)
    # w_down_ref: (tn, H)      down rows for this I-tile
    # o_ref:      (tm, H)
    # acc_ref:    (tm, H) f32 VMEM accumulator, resident across the j axis
    j = pl.program_id(1)

    @pl.when(j == 0)
    def _():
        acc_ref[...] = jnp.zeros_like(acc_ref)

    x = x_ref[...]
    gate = jnp.dot(x, w_gu_ref[0], preferred_element_type=jnp.float32)  # (tm, tn)
    up = jnp.dot(x, w_gu_ref[1], preferred_element_type=jnp.float32)    # (tm, tn)
    act = gate * jax.nn.sigmoid(gate) * up                              # SiluAndMul, f32
    acc_ref[...] += jnp.dot(act.astype(w_down_ref.dtype), w_down_ref[...],
                            preferred_element_type=jnp.float32)

    @pl.when(j == pl.num_programs(1) - 1)
    def _():
        o_ref[...] = acc_ref[...].astype(o_ref.dtype)


def prepare_qwen_mlp_weights(w_gate_up, w_c_proj, dtype=None, align=512):
    """One-time weight prep (do at load/init time, NOT per forward call).

    w_gate_up: (2*I, H) torch nn.Linear layout (gate rows first, then up rows)
    w_c_proj:  (H, I)   torch nn.Linear layout
    Returns:
      w_gu_t:   (2, H, I_pad) [in, out] layout, [0]=gate, [1]=up
      w_down_t: (I_pad, H)    [in, out] layout
    I is zero-padded to a multiple of `align`; padded units contribute 0.
    Production path: dtype=jnp.bfloat16.
    """
    two_I, _ = w_gate_up.shape
    inter = two_I // 2
    i_pad = _round_up(inter, align)
    w_gate_t = jnp.transpose(w_gate_up[:inter, :])   # (H, I)
    w_up_t = jnp.transpose(w_gate_up[inter:, :])     # (H, I)
    w_down_t = jnp.transpose(w_c_proj)               # (I, H)
    if i_pad != inter:
        w_gate_t = jnp.pad(w_gate_t, ((0, 0), (0, i_pad - inter)))
        w_up_t = jnp.pad(w_up_t, ((0, 0), (0, i_pad - inter)))
        w_down_t = jnp.pad(w_down_t, ((0, i_pad - inter), (0, 0)))
    w_gu_t = jnp.stack([w_gate_t, w_up_t], axis=0)   # (2, H, I_pad)
    if dtype is not None:
        w_gu_t = w_gu_t.astype(dtype)
        w_down_t = w_down_t.astype(dtype)
    return w_gu_t, w_down_t


@functools.partial(jax.jit, static_argnames=("tm", "tn", "w_bufs", "vmem_limit"))
def _qwen_mlp_call(x, w_gu, w_down, *, tm, tn, w_bufs, vmem_limit):
    T, H = x.shape
    i_pad = w_gu.shape[2]

    # Pad tokens to the token tile (cheap: only x is copied).
    t_pad = _round_up(T, tm)
    if t_pad != T:
        x = jnp.pad(x, ((0, t_pad - T), (0, 0)))

    # Fallback only when weights were not prepped with a compatible alignment:
    # pad I with zero columns/rows (contributes exactly 0 to the output).
    i_grid = _round_up(i_pad, tn)
    if i_grid != i_pad:
        w_gu = jnp.pad(w_gu, ((0, 0), (0, 0), (0, i_grid - i_pad)))
        w_down = jnp.pad(w_down, ((0, i_grid - i_pad), (0, 0)))

    grid = (t_pad // tm, i_grid // tn)
    w_bytes = w_gu.dtype.itemsize

    cost = pl.CostEstimate(
        flops=6 * t_pad * H * i_grid,
        transcendentals=t_pad * i_grid,
        bytes_accessed=(x.size * x.dtype.itemsize
                        + w_gu.size * w_bytes + w_down.size * w_bytes
                        + t_pad * H * x.dtype.itemsize),
    )

    def w_spec(shape, index_map):
        # Deeper weight pipeline only pays off for the decode/small-tm case.
        if w_bufs > 2 and grid[1] >= w_bufs:
            try:
                return pl.BlockSpec(shape, index_map,
                                    pipeline_mode=pl.Buffered(w_bufs))
            except (TypeError, AttributeError):
                pass
        return pl.BlockSpec(shape, index_map)

    compiler_kwargs = dict(dimension_semantics=("parallel", "arbitrary"))
    if vmem_limit is not None:
        compiler_kwargs["vmem_limit_bytes"] = vmem_limit

    out = pl.pallas_call(
        qwen_mlp_kernel,
        out_shape=jax.ShapeDtypeStruct((t_pad, H), x.dtype),
        grid_spec=pltpu.PrefetchScalarGridSpec(
            num_scalar_prefetch=0,
            grid=grid,
            in_specs=[
                pl.BlockSpec((tm, H), lambda i, j: (i, 0)),   # x row tile
                w_spec((2, H, tn), lambda i, j: (0, 0, j)),   # gate/up column tile
                w_spec((tn, H), lambda i, j: (j, 0)),         # down row tile
            ],
            out_specs=pl.BlockSpec((tm, H), lambda i, j: (i, 0)),
            scratch_shapes=[pltpu.VMEM((tm, H), jnp.float32)],
        ),
        compiler_params=pltpu.CompilerParams(**compiler_kwargs),
        cost_estimate=cost,
    )(x, w_gu, w_down)

    return out[:T] if t_pad != T else out


def qwen_mlp(x, w_gu_t, w_down_t, *, tm=None, tn=None):
    """QWenMLP forward. x: (T, H); w_gu_t: (2, H, I_pad); w_down_t: (I_pad, H).

    tm/tn are optional hints; by default they are chosen per TPU generation,
    per decode/prefill regime and clamped to a VMEM-footprint budget.
    """
    T, H = x.shape
    assert w_gu_t.ndim == 3 and w_gu_t.shape[0] == 2 and w_gu_t.shape[1] == H
    assert w_down_t.shape == (w_gu_t.shape[2], H)
    cfg = _chip_config()
    tm_, tn_, w_bufs = _select_tiles(T, H, w_gu_t.shape[2],
                                     x.dtype, w_gu_t.dtype, x.dtype,
                                     cfg, tm, tn)
    return _qwen_mlp_call(x, w_gu_t, w_down_t, tm=tm_, tn=tn_,
                          w_bufs=w_bufs, vmem_limit=cfg["vmem_limit"])


def qwen_mlp_ref(x, w_gu_t, w_down_t):
    """Pure-JAX reference on the same (possibly bf16) weights, f32 math."""
    xf = x.astype(jnp.float32)
    gate = jnp.dot(xf, w_gu_t[0].astype(jnp.float32),
                   precision=jax.lax.Precision.HIGHEST)
    up = jnp.dot(xf, w_gu_t[1].astype(jnp.float32),
                 precision=jax.lax.Precision.HIGHEST)
    h = jax.nn.silu(gate) * up
    return jnp.dot(h, w_down_t.astype(jnp.float32),
                   precision=jax.lax.Precision.HIGHEST)


if __name__ == "__main__":
    key = jax.random.PRNGKey(0)
    k_gu, k_cp, k_x1, k_x2 = jax.random.split(key, 4)

    hidden_size = 256
    intermediate_size = 1024

    # torch nn.Linear-style weights: [out_features, in_features]
    w_gate_up = jax.random.normal(
        k_gu, (2 * intermediate_size, hidden_size), dtype=jnp.float32) * 0.05
    w_c_proj = jax.random.normal(
        k_cp, (hidden_size, intermediate_size), dtype=jnp.float32) * 0.05

    # One-time weight preparation (bf16 production path), hoisted out of the
    # per-call hot path.
    w_gu_t, w_down_t = prepare_qwen_mlp_weights(w_gate_up, w_c_proj,
                                                dtype=jnp.bfloat16)
    w_gu_t, w_down_t = jax.block_until_ready((w_gu_t, w_down_t))

    # Exercise both the decode-like (tiny T, big tn) and prefill-like paths.
    for name, T, k in (("decode", 8, k_x1), ("prefill", 256, k_x2)):
        x = jax.random.normal(k, (T, hidden_size), dtype=jnp.float32)
        x_bf = x.astype(jnp.bfloat16)

        out = jax.block_until_ready(qwen_mlp(x_bf, w_gu_t, w_down_t))
        ref = qwen_mlp_ref(x_bf, w_gu_t, w_down_t)

        assert out.shape == (T, hidden_size), (name, out.shape)
        assert jnp.allclose(out.astype(jnp.float32), ref,
                            atol=2e-2, rtol=2e-2), f"mismatch vs reference ({name})"

    print("KERNEL_OK")
</pallas_src>

<mosaic_0001>
module attributes {stable_mosaic.version = 11 : i64} {
  func.func @qwen_mlp_kernel(%arg0: i32, %arg1: i32, %arg2: memref<8x256xbf16, #tpu.memory_space<vmem>>, %arg3: memref<2x256x512xbf16, #tpu.memory_space<vmem>>, %arg4: memref<512x256xbf16, #tpu.memory_space<vmem>>, %arg5: memref<8x256xbf16, #tpu.memory_space<vmem>>, %arg6: memref<8x256xf32, #tpu.memory_space<vmem>>) attributes {dimension_semantics = [#tpu.dimension_semantics<parallel>, #tpu.dimension_semantics<arbitrary>], iteration_bounds = array<i64: 1, 2>, scalar_prefetch = 0 : i64, scratch_operands = 1 : i64, tpu.core_type = #tpu.core_type<tc>, window_params = [{transform_indices = @transform_0, window_bounds = array<i64: 8, 256>}, {transform_indices = @transform_1, window_bounds = array<i64: 2, 256, 512>}, {transform_indices = @transform_2, window_bounds = array<i64: 512, 256>}, {transform_indices = @transform_3, window_bounds = array<i64: 8, 256>}]} {
    %c0_i32 = arith.constant 0 : i32
    %0 = arith.cmpi eq, %arg1, %c0_i32 : i32
    %1 = arith.extui %0 : i1 to i32
    %c0_i32_0 = arith.constant 0 : i32
    %2 = arith.cmpi ne, %1, %c0_i32_0 : i32
    scf.if %2 {
      %cst_17 = arith.constant 0.000000e+00 : f32
      %26 = vector.broadcast %cst_17 : f32 to vector<8x256xf32>
      %c0_18 = arith.constant 0 : index
      %c0_19 = arith.constant 0 : index
      %27 = vector.load %arg6[%c0_18, %c0_19] : memref<8x256xf32, #tpu.memory_space<vmem>>, vector<8x256xf32>
      tpu.vector_store %arg6[%c0_18, %c0_19], %26 {strides = array<i32>} : memref<8x256xf32, #tpu.memory_space<vmem>>, vector<8x256xf32>,
    } else {
    }
    %c0 = arith.constant 0 : index
    %c0_1 = arith.constant 0 : index
    %3 = vector.load %arg2[%c0, %c0_1] : memref<8x256xbf16, #tpu.memory_space<vmem>>, vector<8x256xbf16>
    %c0_2 = arith.constant 0 : index
    %c0_3 = arith.constant 0 : index
    %c0_4 = arith.constant 0 : index
    %4 = vector.load %arg3[%c0_2, %c0_3, %c0_4] : memref<2x256x512xbf16, #tpu.memory_space<vmem>>, vector<1x256x512xbf16>
    %5 = vector.shape_cast %4 : vector<1x256x512xbf16> to vector<256x512xbf16>
    %cst = arith.constant dense<0.000000e+00> : vector<8x512xf32>
    %6 = tpu.matmul %3, %5, %cst {dimension_numbers = #tpu.dot_dimension_numbers<[1], [0], [0], [1], [0, 0, 1, 1], [], []>} : vector<8x256xbf16>, vector<256x512xbf16>, vector<8x512xf32> -> vector<8x512xf32>
    %c1 = arith.constant 1 : index
    %c0_5 = arith.constant 0 : index
    %c0_6 = arith.constant 0 : index
    %7 = vector.load %arg3[%c1, %c0_5, %c0_6] : memref<2x256x512xbf16, #tpu.memory_space<vmem>>, vector<1x256x512xbf16>
    %8 = vector.shape_cast %7 : vector<1x256x512xbf16> to vector<256x512xbf16>
    %cst_7 = arith.constant dense<0.000000e+00> : vector<8x512xf32>
    %9 = tpu.matmul %3, %8, %cst_7 {dimension_numbers = #tpu.dot_dimension_numbers<[1], [0], [0], [1], [0, 0, 1, 1], [], []>} : vector<8x256xbf16>, vector<256x512xbf16>, vector<8x512xf32> -> vector<8x512xf32>
    %10 = arith.negf %6 : vector<8x512xf32>
    %11 = math.exp %10 : vector<8x512xf32>
    %cst_8 = arith.constant 1.000000e+00 : f32
    %12 = vector.broadcast %cst_8 : f32 to vector<8x512xf32>
    %13 = arith.addf %12, %11 : vector<8x512xf32>
    %14 = arith.divf %12, %13 : vector<8x512xf32>
    %15 = arith.mulf %6, %14 : vector<8x512xf32>
    %16 = arith.mulf %15, %9 : vector<8x512xf32>
    %c0_9 = arith.constant 0 : index
    %c0_10 = arith.constant 0 : index
    %17 = vector.load %arg6[%c0_9, %c0_10] : memref<8x256xf32, #tpu.memory_space<vmem>>, vector<8x256xf32>
    %18 = arith.truncf %16 : vector<8x512xf32> to vector<8x512xbf16>
    %c0_11 = arith.constant 0 : index
    %c0_12 = arith.constant 0 : index
    %19 = vector.load %arg4[%c0_11, %c0_12] : memref<512x256xbf16, #tpu.memory_space<vmem>>, vector<512x256xbf16>
    %cst_13 = arith.constant dense<0.000000e+00> : vector<8x256xf32>
    %20 = tpu.matmul %18, %19, %cst_13 {dimension_numbers = #tpu.dot_dimension_numbers<[1], [0], [0], [1], [0, 0, 1, 1], [], []>} : vector<8x512xbf16>, vector<512x256xbf16>, vector<8x256xf32> -> vector<8x256xf32>
    %21 = arith.addf %17, %20 : vector<8x256xf32>
    %c0_14 = arith.constant 0 : index
    %c0_15 = arith.constant 0 : index
    %22 = vector.load %arg6[%c0_14, %c0_15] : memref<8x256xf32, #tpu.memory_space<vmem>>, vector<8x256xf32>
    tpu.vector_store %arg6[%c0_14, %c0_15], %21 {strides = array<i32>} : memref<8x256xf32, #tpu.memory_space<vmem>>, vector<8x256xf32>,
    %c1_i32 = arith.constant 1 : i32
    %23 = arith.cmpi eq, %arg1, %c1_i32 : i32
    %24 = arith.extui %23 : i1 to i32
    %c0_i32_16 = arith.constant 0 : i32
    %25 = arith.cmpi ne, %24, %c0_i32_16 : i32
    scf.if %25 {
      %c0_17 = arith.constant 0 : index
      %c0_18 = arith.constant 0 : index
      %26 = vector.load %arg6[%c0_17, %c0_18] : memref<8x256xf32, #tpu.memory_space<vmem>>, vector<8x256xf32>
      %27 = arith.truncf %26 : vector<8x256xf32> to vector<8x256xbf16>
      %c0_19 = arith.constant 0 : index
      %c0_20 = arith.constant 0 : index
      %28 = vector.load %arg5[%c0_19, %c0_20] : memref<8x256xbf16, #tpu.memory_space<vmem>>, vector<8x256xbf16>
      tpu.vector_store %arg5[%c0_19, %c0_20], %27 {strides = array<i32>} : memref<8x256xbf16, #tpu.memory_space<vmem>>, vector<8x256xbf16>,
    } else {
    }
    return
  }
  func.func @transform_0(%arg0: i32, %arg1: i32) -> (i32, i32) {
    %c0_i32 = arith.constant 0 : i32
    %c0_i32_0 = arith.constant 0 : i32
    return %arg0, %c0_i32 : i32, i32
  }
  func.func @transform_1(%arg0: i32, %arg1: i32) -> (i32, i32, i32) {
    %c0_i32 = arith.constant 0 : i32
    %c0_i32_0 = arith.constant 0 : i32
    %c0_i32_1 = arith.constant 0 : i32
    return %c0_i32, %c0_i32_0, %arg1 : i32, i32, i32
  }
  func.func @transform_2(%arg0: i32, %arg1: i32) -> (i32, i32) {
    %c0_i32 = arith.constant 0 : i32
    %c0_i32_0 = arith.constant 0 : i32
    return %arg1, %c0_i32 : i32, i32
  }
  func.func @transform_3(%arg0: i32, %arg1: i32) -> (i32, i32) {
    %c0_i32 = arith.constant 0 : i32
    %c0_i32_0 = arith.constant 0 : i32
    return %arg0, %c0_i32 : i32, i32
  }
}

</mosaic_0001>

<llo_original>
// kernel: _qwen_mlp_call.1
$region0: #{_qwen_mlp_call.1}
  #allocation0 [shape = 'u32[]', space=smem, size = 0x4, offset = 0x4, fixed_abs, tag = 'smem constant byte address 0x4 - core index']
  #allocation1 [shape = 'u32[72,128]{1,0:T(1,128)}', space=vmem, size = 0x9000, scoped, tag = 'internal scratch']
  #allocation2 [shape = 'f32[8,256]{1,0:T(8,128)}', space=vmem, size = 0x2000, scoped, tag = 'scratch operand']
  %s0 = inlined_call_operand.hbm [shape: bf16[8,256], index: 0, kind: input, shape index: {}]
  %s1 = inlined_call_operand.hbm [shape: bf16[2,256,1024], index: 1, kind: input, shape index: {}]
  %s2 = inlined_call_operand.hbm [shape: bf16[1024,256], index: 2, kind: input, shape index: {}]
  %s3 = inlined_call_operand.hbm [shape: bf16[8,256], index: 3, kind: output, shape index: {}]
  %s4 = sld [smem:[#allocation0]]
  $region65: #{_qwen_mlp_call.1} parent=0
    _
  %s6 = ssub.s32 1, %s4
  %s7 = scalar_select 0, %s6, %s4
  $region1: #{_qwen_mlp_call.1} parent=0
    #allocation3 [shape = 'u8[4096]{0}', space=vmem, size = 0x1000, scoped, tag = 'input window, operand 0, single buffered']
    #allocation4 [shape = 's32[2]{0}', space=sflag, size = 0x8, scoped, tag = 'scoped memory for _qwen_mlp_call.1']
    #allocation5 [shape = 's32[2]{0}', space=sflag, size = 0x8, scoped, tag = 'scoped memory for _qwen_mlp_call.1']
    #allocation6 [shape = 'u8[1048576]{0}', space=vmem, size = 0x100000, scoped, tag = 'input window, operand 1']
    #allocation7 [shape = 's32[2]{0}', space=sflag, size = 0x8, scoped, tag = 'scoped memory for _qwen_mlp_call.1']
    #allocation8 [shape = 'u8[524288]{0}', space=vmem, size = 0x80000, scoped, tag = 'input window, operand 2']
    #allocation9 [shape = 'u8[4096]{0}', space=vmem, size = 0x1000, scoped, tag = 'output window, operand 0, single buffered']
    %8 = vsyncpa [#allocation4], 0
    %9 = vsyncpa [#allocation7], 0
    %s10 = scalar_lea.sflag [#allocation7], 1
    %11 = vsyncpa %s10, 0
    %12 = vsyncpa [#allocation5], 0
    loop: start=0, step=1, limit=4
    $region2: #{_qwen_mlp_call.1} parent=1 // loop_pre_header
      _
    $region3: #{_qwen_mlp_call.1} parent=1 // loop_header
      %s14 = sphi 0, %s18
      %p15 = scmp.ge.s32.totalorder %s14, 4
      %s21 = sphi 0, %s33
      %s22 = sphi 0, %s29
      %s23 = sphi 0, %s21
      %s24 = sphi 0, %s22
      %s25 = sphi 0, %s23
      %s26 = sphi 0, %s24
      %s36 = sphi 0, %s38
      %s39 = sphi 0, %s36
      %s40 = sphi 0, %s39
      %s56 = sphi 0, %s40
      %s62 = sphi 0, %s64
      %s65 = sphi 0, %s62
      %s66 = sphi 0, %s65
      %s82 = sphi 0, %s66
      %s88 = sphi 0, %s90
      %s91 = sphi 0, %s88
      %s92 = sphi 0, %s91
      %s108 = sphi 0, %s92
      %s114 = sphi 0, %s116
      %s117 = sphi 0, %s114
      %s118 = sphi 0, %s117
      %s134 = sphi 0, %s118
    $region4: #{_qwen_mlp_call.1} parent=1 // loop_header_branch
      %17 = sbr.rel (%p15) target = $region8
    $region5: #{_qwen_mlp_call.1} parent=1 // loop_body
      %s19 = ssub.s32 %s14, 1
      %s20 = ssub.s32 %s14, 2
      %s27 = sadd.s32 1, %s22
      %p28 = scmp.ge.s32.totalorder %s27, 2
      %s29 = scalar_select %p28, 0, %s27
      %s30 = sadd.s32 1, %s21
      %s31 = scalar_select %p28, %s30, %s21
      %p32 = scmp.ge.s32.totalorder %s31, 1
      %s33 = scalar_select %p32, 0, %s31
      %s34 = ssub.s32 %s21, %s33
      %p35 = scmp.eq.s32.totalorder %s34, 0
      %s37 = sadd.s32 %s36, 1
      %s38 = scalar_select %p35, %s36, %s37
      %p41 = pneg %p35
      %p42 = scmp.eq.s32.totalorder %s14, 1
      %p43 = por %p41, %p42
      %p44 = scmp.ne.s32.totalorder %s36, %s39
      %p45 = scmp.eq.s32.totalorder %s14, 0
      %p46 = por %p44, %p45
      %p47 = scmp.ne.s32.totalorder %s36, %s39
      %p48 = scmp.eq.s32.totalorder %s19, 1
      %p49 = por %p47, %p48
      %p50 = scmp.ne.s32.totalorder %s39, %s40
      %p51 = scmp.eq.s32.totalorder %s19, 0
      %p52 = por %p50, %p51
      %p53 = scmp.ne.s32.totalorder %s39, %s40
      %p54 = scmp.eq.s32.totalorder %s20, 1
      %p55 = por %p53, %p54
      %p57 = scmp.ne.s32.totalorder %s40, %s56
      %p58 = scmp.eq.s32.totalorder %s20, 0
      %p59 = por %p57, %p58
      %s60 = ssub.s32 %s22, %s29
      %p61 = scmp.eq.s32.totalorder %s60, 0
      %s63 = sadd.s32 %s62, 1
      %s64 = scalar_select %p61, %s62, %s63
      %p67 = pneg %p61
      %p68 = scmp.eq.s32.totalorder %s14, 1
      %p69 = por %p67, %p68
      %p70 = scmp.ne.s32.totalorder %s62, %s65
      %p71 = scmp.eq.s32.totalorder %s14, 0
      %p72 = por %p70, %p71
      %p73 = scmp.ne.s32.totalorder %s62, %s65
      %p74 = scmp.eq.s32.totalorder %s19, 1
      %p75 = por %p73, %p74
      %p76 = scmp.ne.s32.totalorder %s65, %s66
      %p77 = scmp.eq.s32.totalorder %s19, 0
      %p78 = por %p76, %p77
      %p79 = scmp.ne.s32.totalorder %s65, %s66
      %p80 = scmp.eq.s32.totalorder %s20, 1
      %p81 = por %p79, %p80
      %p83 = scmp.ne.s32.totalorder %s66, %s82
      %p84 = scmp.eq.s32.totalorder %s20, 0
      %p85 = por %p83, %p84
      %s86 = ssub.s32 %s22, %s29
      %p87 = scmp.eq.s32.totalorder %s86, 0
      %s89 = sadd.s32 %s88, 1
      %s90 = scalar_select %p87, %s88, %s89
      %p93 = pneg %p87
      %p94 = scmp.eq.s32.totalorder %s14, 1
      %p95 = por %p93, %p94
      %p96 = scmp.ne.s32.totalorder %s88, %s91
      %p97 = scmp.eq.s32.totalorder %s14, 0
      %p98 = por %p96, %p97
      %p99 = scmp.ne.s32.totalorder %s88, %s91
      %p100 = scmp.eq.s32.totalorder %s19, 1
      %p101 = por %p99, %p100
      %p102 = scmp.ne.s32.totalorder %s91, %s92
      %p103 = scmp.eq.s32.totalorder %s19, 0
      %p104 = por %p102, %p103
      %p105 = scmp.ne.s32.totalorder %s91, %s92
      %p106 = scmp.eq.s32.totalorder %s20, 1
      %p107 = por %p105, %p106
      %p109 = scmp.ne.s32.totalorder %s92, %s108
      %p110 = scmp.eq.s32.totalorder %s20, 0
      %p111 = por %p109, %p110
      %s112 = ssub.s32 %s21, %s33
      %p113 = scmp.eq.s32.totalorder %s112, 0
      %s115 = sadd.s32 %s114, 1
      %s116 = scalar_select %p113, %s114, %s115
      %p119 = pneg %p113
      %p120 = scmp.eq.s32.totalorder %s14, 1
      %p121 = por %p119, %p120
      %p122 = scmp.ne.s32.totalorder %s114, %s117
      %p123 = scmp.eq.s32.totalorder %s14, 0
      %p124 = por %p122, %p123
      %p125 = scmp.ne.s32.totalorder %s114, %s117
      %p126 = scmp.eq.s32.totalorder %s19, 1
      %p127 = por %p125, %p126
      %p128 = scmp.ne.s32.totalorder %s117, %s118
      %p129 = scmp.eq.s32.totalorder %s19, 0
      %p130 = por %p128, %p129
      %p131 = scmp.ne.s32.totalorder %s117, %s118
      %p132 = scmp.eq.s32.totalorder %s20, 1
      %p133 = por %p131, %p132
      %p135 = scmp.ne.s32.totalorder %s118, %s134
      %p136 = scmp.eq.s32.totalorder %s20, 0
      %p137 = por %p135, %p136
      %p138 = scmp.le.s32.totalorder 1, %s14
      %p139 = scmp.lt.s32.totalorder %s14, 3
      %p140 = pnand %p138, %p139
      %p141 = pneg %p140
      // Predicated region
      $region9: #{_qwen_mlp_call.1} parent=5 // pred_check
        _
      $region10: #{_qwen_mlp_call.1} parent=5 // pred_check_branch
        %143 = sbr.rel (%p140) target = $region12
      $region11: #{_qwen_mlp_call.1} parent=5 // pred_region
        %s144 = ssub.s32 %s14, 1
        // Predicated region
        $region13: #{_qwen_mlp_call.1} parent=11 // pred_check
          %p145 = pneg %p52
        $region14: #{_qwen_mlp_call.1} parent=11 // pred_check_branch
          %147 = sbr.rel (%p145) target = $region16
        $region15: #{_qwen_mlp_call.1} parent=11 // pred_region
          %149 = vsyncadd [#allocation4], 0
          %s150 = smul.addr %s23, 2
          %s151 = smul.addr %s150, 4
          %s152 = scalar_lea.hbm %s0, %s151
          %s154 = sshll.u32 %s152, 4
          %s155 = int_to_ptr.hbm [resolvable:$true] %s154
          %s156 = sshll.u32 [#allocation3], 4
          %s157 = int_to_ptr.vmem [resolvable:$true] %s156
          %159 = dma.hbm_to_vmem [thread:$0]  %s155, 128, %s157, [#allocation4]
        $region16: #{_qwen_mlp_call.1} parent=11 // pred_fallthru
          _
      $region12: #{_qwen_mlp_call.1} parent=5 // pred_fallthru
        _
      %p160 = scmp.lt.s32.totalorder %s14, 2
      // Predicated region
      $region17: #{_qwen_mlp_call.1} parent=5 // pred_check
        %p161 = pneg %p160
      $region18: #{_qwen_mlp_call.1} parent=5 // pred_check_branch
        %163 = sbr.rel (%p161) target = $region20
      $region19: #{_qwen_mlp_call.1} parent=5 // pred_region
        // Predicated region
        $region21: #{_qwen_mlp_call.1} parent=19 // pred_check
          %p164 = pneg %p72
        $region22: #{_qwen_mlp_call.1} parent=19 // pred_check_branch
          %166 = sbr.rel (%p164) target = $region24
        $region23: #{_qwen_mlp_call.1} parent=19 // pred_region
          %s167 = sand.u32 %s14, 1
          %s168 = scalar_lea.sflag [#allocation7], %s167
          %s169 = sand.u32 %s62, 1
          %s170 = smul.addr %s169, 1024
          %s171 = scalar_lea.vmem [#allocation6], %s170
          %s172 = smul.u32 4, %s22
          %174 = vsyncadd %s168, 0
          %s175 = smul.addr %s172, 4
          %s176 = scalar_lea.hbm %s1, %s175
          %s177 = sshll.u32 %s176, 4
          %s178 = int_to_ptr.hbm [resolvable:$true] %s177
          %s179 = sshll.u32 %s171, 4
          %s180 = int_to_ptr.vmem [resolvable:$true] %s179
          %185 = dma.hbm_to_vmem [thread:$0]  %s178, 16384, %s180, %s168, 512, 256, 16
        $region24: #{_qwen_mlp_call.1} parent=19 // pred_fallthru
          _
        // Predicated region
        $region25: #{_qwen_mlp_call.1} parent=19 // pred_check
          %p186 = pneg %p98
        $region26: #{_qwen_mlp_call.1} parent=19 // pred_check_branch
          %188 = sbr.rel (%p186) target = $region28
        $region27: #{_qwen_mlp_call.1} parent=19 // pred_region
          %s189 = sand.u32 %s14, 1
          %s190 = scalar_lea.sflag [#allocation7], %s189
          %s191 = sand.u32 %s88, 1
          %s192 = smul.addr %s191, 512
          %s193 = scalar_lea.vmem [#allocation8], %s192
          %s194 = smul.u32 64, %s22
          %196 = vsyncadd %s190, 0
          %s197 = smul.addr %s194, 2
          %s198 = smul.addr %s197, 4
          %s199 = scalar_lea.hbm %s2, %s198
          %s200 = sshll.u32 %s199, 4
          %s201 = int_to_ptr.hbm [resolvable:$true] %s200
          %s202 = sshll.u32 %s193, 4
          %s203 = int_to_ptr.vmem [resolvable:$true] %s202
          %208 = dma.hbm_to_vmem [thread:$0]  %s201, 8192, %s203, %s190, 128, 128, 8
        $region28: #{_qwen_mlp_call.1} parent=19 // pred_fallthru
          _
      $region20: #{_qwen_mlp_call.1} parent=5 // pred_fallthru
        _
      %p209 = scmp.le.s32.totalorder 1, %s14
      %p210 = scmp.lt.s32.totalorder %s14, 3
      %p211 = pnand %p209, %p210
      %p212 = pneg %p211
      // Predicated region
      $region29: #{_qwen_mlp_call.1} parent=5 // pred_check
        _
      $region30: #{_qwen_mlp_call.1} parent=5 // pred_check_branch
        %214 = sbr.rel (%p211) target = $region32
      $region31: #{_qwen_mlp_call.1} parent=5 // pred_region
        %s215 = ssub.s32 %s14, 1
        // Predicated region
        $region33: #{_qwen_mlp_call.1} parent=31 // pred_check
          %p216 = pneg %p52
        $region34: #{_qwen_mlp_call.1} parent=31 // pred_check_branch
          %218 = sbr.rel (%p216) target = $region36
        $region35: #{_qwen_mlp_call.1} parent=31 // pred_region
          %220 = dma.done [#allocation4], 128
        $region36: #{_qwen_mlp_call.1} parent=31 // pred_fallthru
          _
        %s221 = sand.u32 %s19, 1
        %s222 = scalar_lea.sflag [#allocation7], %s221
        %s223 = sand.u32 %s65, 1
        %s224 = smul.addr %s223, 1024
        %s225 = scalar_lea.vmem [#allocation6], %s224
        // Predicated region
        $region37: #{_qwen_mlp_call.1} parent=31 // pred_check
          %p226 = pneg %p78
        $region38: #{_qwen_mlp_call.1} parent=31 // pred_check_branch
          %228 = sbr.rel (%p226) target = $region40
        $region39: #{_qwen_mlp_call.1} parent=31 // pred_region
          %230 = dma.done %s222, 16384
        $region40: #{_qwen_mlp_call.1} parent=31 // pred_fallthru
          _
        %s231 = sand.u32 %s19, 1
        %s232 = scalar_lea.sflag [#allocation7], %s231
        %s233 = sand.u32 %s91, 1
        %s234 = smul.addr %s233, 512
        %s235 = scalar_lea.vmem [#allocation8], %s234
        // Predicated region
        $region41: #{_qwen_mlp_call.1} parent=31 // pred_check
          %p236 = pneg %p104
        $region42: #{_qwen_mlp_call.1} parent=31 // pred_check_branch
          %238 = sbr.rel (%p236) target = $region44
        $region43: #{_qwen_mlp_call.1} parent=31 // pred_region
          %240 = dma.done %s232, 8192
        $region44: #{_qwen_mlp_call.1} parent=31 // pred_fallthru
          _
        %p241 = pneg %p52
        %p242 = pneg %p49
        %s243 = sand.u32 %s19, 1
        %s244 = scalar_lea.sflag [#allocation7], %s243
        %s245 = sand.u32 %s65, 1
        %s246 = smul.addr %s245, 1024
        %s247 = scalar_lea.vmem [#allocation6], %s246
        %p248 = pneg %p78
        %p249 = pneg %p75
        %s250 = sand.u32 %s19, 1
        %s251 = scalar_lea.sflag [#allocation7], %s250
        %s252 = sand.u32 %s91, 1
        %s253 = smul.addr %s252, 512
        %s254 = scalar_lea.vmem [#allocation8], %s253
        %p255 = pneg %p104
        %p256 = pneg %p101
        %p257 = pneg %p130
        %p258 = pneg %p127
        %s259 = smul.u32 4, %s24
        %s260 = smul.u32 64, %s24
        %p261 = scmp.eq.s32.totalorder %s24, 0
        // Predicated region
        $region45: #{_qwen_mlp_call.1} parent=31 // pred_check
          %p262 = pneg %p261
        $region46: #{_qwen_mlp_call.1} parent=31 // pred_check_branch
          %264 = sbr.rel (%p262) target = $region48
        $region47: #{_qwen_mlp_call.1} parent=31 // pred_region
          %265 = vst [vmem:[#allocation2] sm:$0xff] 0.0
          %266 = vst [vmem:[#allocation2 + $0x8] sm:$0xff] 0.0
        $region48: #{_qwen_mlp_call.1} parent=31 // pred_fallthru
          _
        %v267 = vld [vmem:[#allocation3] sm:$0xff]
        %v268 = vld [vmem:[%s225] sm:$0xff]
        %v269 = vld [vmem:[%s225 + $0x8] sm:$0xff]
        %v270 = vld [vmem:[%s225 + $0x10] sm:$0xff]
        %v271 = vld [vmem:[%s225 + $0x18] sm:$0xff]
        %v272 = vld [vmem:[%s225 + $0x20] sm:$0xff]
        %v273 = vld [vmem:[%s225 + $0x28] sm:$0xff]
        %v274 = vld [vmem:[%s225 + $0x30] sm:$0xff]
        %v275 = vld [vmem:[%s225 + $0x38] sm:$0xff]
        %v276 = vld [vmem:[%s225 + $0x40] sm:$0xff]
        %v277 = vld [vmem:[%s225 + $0x48] sm:$0xff]
        %v278 = vld [vmem:[%s225 + $0x50] sm:$0xff]
        %v279 = vld [vmem:[%s225 + $0x58] sm:$0xff]
        %v280 = vld [vmem:[%s225 + $0x60] sm:$0xff]
        %v281 = vld [vmem:[%s225 + $0x68] sm:$0xff]
        %v282 = vld [vmem:[%s225 + $0x70] sm:$0xff]
        %v283 = vld [vmem:[%s225 + $0x78] sm:$0xff]
        %v284 = vld [vmem:[%s225 + $0x80] sm:$0xff]
        %v285 = vld [vmem:[%s225 + $0x88] sm:$0xff]
        %v286 = vld [vmem:[%s225 + $0x90] sm:$0xff]
        %v287 = vld [vmem:[%s225 + $0x98] sm:$0xff]
        %v288 = vld [vmem:[%s225 + $0xa0] sm:$0xff]
        %v289 = vld [vmem:[%s225 + $0xa8] sm:$0xff]
        %v290 = vld [vmem:[%s225 + $0xb0] sm:$0xff]
        %v291 = vld [vmem:[%s225 + $0xb8] sm:$0xff]
        %v292 = vld [vmem:[%s225 + $0xc0] sm:$0xff]
        %v293 = vld [vmem:[%s225 + $0xc8] sm:$0xff]
        %v294 = vld [vmem:[%s225 + $0xd0] sm:$0xff]
        %v295 = vld [vmem:[%s225 + $0xd8] sm:$0xff]
        %v296 = vld [vmem:[%s225 + $0xe0] sm:$0xff]
        %v297 = vld [vmem:[%s225 + $0xe8] sm:$0xff]
        %v298 = vld [vmem:[%s225 + $0xf0] sm:$0xff]
        %v299 = vld [vmem:[%s225 + $0xf8] sm:$0xff]
        %v300 = vld [vmem:[%s225 + $0x100] sm:$0xff]
        %v301 = vld [vmem:[%s225 + $0x108] sm:$0xff]
        %v302 = vld [vmem:[%s225 + $0x110] sm:$0xff]
        %v303 = vld [vmem:[%s225 + $0x118] sm:$0xff]
        %v304 = vld [vmem:[%s225 + $0x120] sm:$0xff]
        %v305 = vld [vmem:[%s225 + $0x128] sm:$0xff]
        %v306 = vld [vmem:[%s225 + $0x130] sm:$0xff]
        %v307 = vld [vmem:[%s225 + $0x138] sm:$0xff]
        %v308 = vld [vmem:[%s225 + $0x140] sm:$0xff]
        %v309 = vld [vmem:[%s225 + $0x148] sm:$0xff]
        %v310 = vld [vmem:[%s225 + $0x150] sm:$0xff]
        %v311 = vld [vmem:[%s225 + $0x158] sm:$0xff]
        %v312 = vld [vmem:[%s225 + $0x160] sm:$0xff]
        %v313 = vld [vmem:[%s225 + $0x168] sm:$0xff]
        %v314 = vld [vmem:[%s225 + $0x170] sm:$0xff]
        %v315 = vld [vmem:[%s225 + $0x178] sm:$0xff]
        %v316 = vld [vmem:[%s225 + $0x180] sm:$0xff]
        %v317 = vld [vmem:[%s225 + $0x188] sm:$0xff]
        %v318 = vld [vmem:[%s225 + $0x190] sm:$0xff]
        %v319 = vld [vmem:[%s225 + $0x198] sm:$0xff]
        %v320 = vld [vmem:[%s225 + $0x1a0] sm:$0xff]
        %v321 = vld [vmem:[%s225 + $0x1a8] sm:$0xff]
        %v322 = vld [vmem:[%s225 + $0x1b0] sm:$0xff]
        %v323 = vld [vmem:[%s225 + $0x1b8] sm:$0xff]
        %v324 = vld [vmem:[%s225 + $0x1c0] sm:$0xff]
        %v325 = vld [vmem:[%s225 + $0x1c8] sm:$0xff]
        %v326 = vld [vmem:[%s225 + $0x1d0] sm:$0xff]
        %v327 = vld [vmem:[%s225 + $0x1d8] sm:$0xff]
        %v328 = vld [vmem:[%s225 + $0x1e0] sm:$0xff]
        %v329 = vld [vmem:[%s225 + $0x1e8] sm:$0xff]
        %v330 = vld [vmem:[%s225 + $0x1f0] sm:$0xff]
        %v331 = vld [vmem:[%s225 + $0x1f8] sm:$0xff]
        %v333 = vunpack.c.l.b16 %v267
        %v334 = vunpack.c.h.b16 %v267
        %v335 = vpack.c.b16 %v333, %v333
        %v336 = vpack.c.b16 %v334, %v334
        %v403 = vunpack.c.l.b16 %v268
        %v404 = vunpack.c.h.b16 %v268
        %v405 = vunpack.c.l.b16 %v269
        %v406 = vunpack.c.h.b16 %v269
        %v407 = vunpack.c.l.b16 %v270
        %v408 = vunpack.c.h.b16 %v270
        %v409 = vunpack.c.l.b16 %v271
        %v410 = vunpack.c.h.b16 %v271
        %v411 = vunpack.c.l.b16 %v272
        %v412 = vunpack.c.h.b16 %v272
        %v413 = vunpack.c.l.b16 %v273
        %v414 = vunpack.c.h.b16 %v273
        %v415 = vunpack.c.l.b16 %v274
        %v416 = vunpack.c.h.b16 %v274
        %v417 = vunpack.c.l.b16 %v275
        %v418 = vunpack.c.h.b16 %v275
        %v419 = vunpack.c.l.b16 %v276
        %v420 = vunpack.c.h.b16 %v276
        %v421 = vunpack.c.l.b16 %v277
        %v422 = vunpack.c.h.b16 %v277
        %v423 = vunpack.c.l.b16 %v278
        %v424 = vunpack.c.h.b16 %v278
        %v425 = vunpack.c.l.b16 %v279
        %v426 = vunpack.c.h.b16 %v279
        %v427 = vunpack.c.l.b16 %v280
        %v428 = vunpack.c.h.b16 %v280
        %v429 = vunpack.c.l.b16 %v281
        %v430 = vunpack.c.h.b16 %v281
        %v431 = vunpack.c.l.b16 %v282
        %v432 = vunpack.c.h.b16 %v282
        %v433 = vunpack.c.l.b16 %v283
        %v434 = vunpack.c.h.b16 %v283
        %v435 = vunpack.c.l.b16 %v284
        %v436 = vunpack.c.h.b16 %v284
        %v437 = vunpack.c.l.b16 %v285
        %v438 = vunpack.c.h.b16 %v285
        %v439 = vunpack.c.l.b16 %v286
        %v440 = vunpack.c.h.b16 %v286
        %v441 = vunpack.c.l.b16 %v287
        %v442 = vunpack.c.h.b16 %v287
        %v443 = vunpack.c.l.b16 %v288
        %v444 = vunpack.c.h.b16 %v288
        %v445 = vunpack.c.l.b16 %v289
        %v446 = vunpack.c.h.b16 %v289
        %v447 = vunpack.c.l.b16 %v290
        %v448 = vunpack.c.h.b16 %v290
        %v449 = vunpack.c.l.b16 %v291
        %v450 = vunpack.c.h.b16 %v291
        %v451 = vunpack.c.l.b16 %v292
        %v452 = vunpack.c.h.b16 %v292
        %v453 = vunpack.c.l.b16 %v293
        %v454 = vunpack.c.h.b16 %v293
        %v455 = vunpack.c.l.b16 %v294
        %v456 = vunpack.c.h.b16 %v294
        %v457 = vunpack.c.l.b16 %v295
        %v458 = vunpack.c.h.b16 %v295
        %v459 = vunpack.c.l.b16 %v296
        %v460 = vunpack.c.h.b16 %v296
        %v461 = vunpack.c.l.b16 %v297
        %v462 = vunpack.c.h.b16 %v297
        %v463 = vunpack.c.l.b16 %v298
        %v464 = vunpack.c.h.b16 %v298
        %v465 = vunpack.c.l.b16 %v299
        %v466 = vunpack.c.h.b16 %v299
        %v467 = vunpack.c.l.b16 %v300
        %v468 = vunpack.c.h.b16 %v300
        %v469 = vunpack.c.l.b16 %v301
        %v470 = vunpack.c.h.b16 %v301
        %v471 = vunpack.c.l.b16 %v302
        %v472 = vunpack.c.h.b16 %v302
        %v473 = vunpack.c.l.b16 %v303
        %v474 = vunpack.c.h.b16 %v303
        %v475 = vunpack.c.l.b16 %v304
        %v476 = vunpack.c.h.b16 %v304
        %v477 = vunpack.c.l.b16 %v305
        %v478 = vunpack.c.h.b16 %v305
        %v479 = vunpack.c.l.b16 %v306
        %v480 = vunpack.c.h.b16 %v306
        %v481 = vunpack.c.l.b16 %v307
        %v482 = vunpack.c.h.b16 %v307
        %v483 = vunpack.c.l.b16 %v308
        %v484 = vunpack.c.h.b16 %v308
        %v485 = vunpack.c.l.b16 %v309
        %v486 = vunpack.c.h.b16 %v309
        %v487 = vunpack.c.l.b16 %v310
        %v488 = vunpack.c.h.b16 %v310
        %v489 = vunpack.c.l.b16 %v311
        %v490 = vunpack.c.h.b16 %v311
        %v491 = vunpack.c.l.b16 %v312
        %v492 = vunpack.c.h.b16 %v312
        %v493 = vunpack.c.l.b16 %v313
        %v494 = vunpack.c.h.b16 %v313
        %v495 = vunpack.c.l.b16 %v314
        %v496 = vunpack.c.h.b16 %v314
        %v497 = vunpack.c.l.b16 %v315
        %v498 = vunpack.c.h.b16 %v315
        %v499 = vunpack.c.l.b16 %v316
        %v500 = vunpack.c.h.b16 %v316
        %v501 = vunpack.c.l.b16 %v317
        %v502 = vunpack.c.h.b16 %v317
        %v503 = vunpack.c.l.b16 %v318
        %v504 = vunpack.c.h.b16 %v318
        %v505 = vunpack.c.l.b16 %v319
        %v506 = vunpack.c.h.b16 %v319
        %v507 = vunpack.c.l.b16 %v320
        %v508 = vunpack.c.h.b16 %v320
        %v509 = vunpack.c.l.b16 %v321
        %v510 = vunpack.c.h.b16 %v321
        %v511 = vunpack.c.l.b16 %v322
        %v512 = vunpack.c.h.b16 %v322
        %v513 = vunpack.c.l.b16 %v323
        %v514 = vunpack.c.h.b16 %v323
        %v515 = vunpack.c.l.b16 %v324
        %v516 = vunpack.c.h.b16 %v324
        %v517 = vunpack.c.l.b16 %v325
        %v518 = vunpack.c.h.b16 %v325
        %v519 = vunpack.c.l.b16 %v326
        %v520 = vunpack.c.h.b16 %v326
        %v521 = vunpack.c.l.b16 %v327
        %v522 = vunpack.c.h.b16 %v327
        %v523 = vunpack.c.l.b16 %v328
        %v524 = vunpack.c.h.b16 %v328
        %v525 = vunpack.c.l.b16 %v329
        %v526 = vunpack.c.h.b16 %v329
        %v527 = vunpack.c.l.b16 %v330
        %v528 = vunpack.c.h.b16 %v330
        %v529 = vunpack.c.l.b16 %v331
        %v530 = vunpack.c.h.b16 %v331
        %v531 = vpack.c.b16 %v407, %v403
        %v532 = vpack.c.b16 %v408, %v404
        %v533 = vpack.c.b16 %v409, %v405
        %v534 = vpack.c.b16 %v410, %v406
        %v535 = vpack.c.b16 %v415, %v411
        %v536 = vpack.c.b16 %v416, %v412
        %v537 = vpack.c.b16 %v417, %v413
        %v538 = vpack.c.b16 %v418, %v414
        %v539 = vpack.c.b16 %v423, %v419
        %v540 = vpack.c.b16 %v424, %v420
        %v541 = vpack.c.b16 %v425, %v421
        %v542 = vpack.c.b16 %v426, %v422
        %v543 = vpack.c.b16 %v431, %v427
        %v544 = vpack.c.b16 %v432, %v428
        %v545 = vpack.c.b16 %v433, %v429
        %v546 = vpack.c.b16 %v434, %v430
        %v547 = vpack.c.b16 %v439, %v435
        %v548 = vpack.c.b16 %v440, %v436
        %v549 = vpack.c.b16 %v441, %v437
        %v550 = vpack.c.b16 %v442, %v438
        %v551 = vpack.c.b16 %v447, %v443
        %v552 = vpack.c.b16 %v448, %v444
        %v553 = vpack.c.b16 %v449, %v445
        %v554 = vpack.c.b16 %v450, %v446
        %v555 = vpack.c.b16 %v455, %v451
        %v556 = vpack.c.b16 %v456, %v452
        %v557 = vpack.c.b16 %v457, %v453
        %v558 = vpack.c.b16 %v458, %v454
        %v559 = vpack.c.b16 %v463, %v459
        %v560 = vpack.c.b16 %v464, %v460
        %v561 = vpack.c.b16 %v465, %v461
        %v562 = vpack.c.b16 %v466, %v462
        %v563 = vpack.c.b16 %v471, %v467
        %v564 = vpack.c.b16 %v472, %v468
        %v565 = vpack.c.b16 %v473, %v469
        %v566 = vpack.c.b16 %v474, %v470
        %v567 = vpack.c.b16 %v479, %v475
        %v568 = vpack.c.b16 %v480, %v476
        %v569 = vpack.c.b16 %v481, %v477
        %v570 = vpack.c.b16 %v482, %v478
        %v571 = vpack.c.b16 %v487, %v483
        %v572 = vpack.c.b16 %v488, %v484
        %v573 = vpack.c.b16 %v489, %v485
        %v574 = vpack.c.b16 %v490, %v486
        %v575 = vpack.c.b16 %v495, %v491
        %v576 = vpack.c.b16 %v496, %v492
        %v577 = vpack.c.b16 %v497, %v493
        %v578 = vpack.c.b16 %v498, %v494
        %v579 = vpack.c.b16 %v503, %v499
        %v580 = vpack.c.b16 %v504, %v500
        %v581 = vpack.c.b16 %v505, %v501
        %v582 = vpack.c.b16 %v506, %v502
        %v583 = vpack.c.b16 %v511, %v507
        %v584 = vpack.c.b16 %v512, %v508
        %v585 = vpack.c.b16 %v513, %v509
        %v586 = vpack.c.b16 %v514, %v510
        %v587 = vpack.c.b16 %v519, %v515
        %v588 = vpack.c.b16 %v520, %v516
        %v589 = vpack.c.b16 %v521, %v517
        %v590 = vpack.c.b16 %v522, %v518
        %v591 = vpack.c.b16 %v527, %v523
        %v592 = vpack.c.b16 %v528, %v524
        %v593 = vpack.c.b16 %v529, %v525
        %v594 = vpack.c.b16 %v530, %v526
        %659 = vmatpush.bf16.msra.mxu0 %v559
        %660 = vmatpush.bf16.msra.mxu0 %v555
        %661 = vmatpush.bf16.msra.mxu0 %v551
        %662 = vmatpush.bf16.msra.mxu0 %v547
        %663 = vmatpush.bf16.msra.mxu0 %v543
        %664 = vmatpush.bf16.msra.mxu0 %v539
        %665 = vmatpush.bf16.msra.mxu0 %v535
        %666 = vmatpush.bf16.msra.mxu0 %v531
        %667 = vmatmul.bf16.gmra.mxu0 %v335
        %v668 = vpop.f32.mrf.mxu0
        %v669 = vadd.f32 0.0, %v668
        %v670 = vpop.f32.mrf.mxu0
        %671 = vdwg.mxu0
        %672 = vmatpush.bf16.msra.mxu0 %v591
        %673 = vmatpush.bf16.msra.mxu0 %v587
        %674 = vmatpush.bf16.msra.mxu0 %v583
        %675 = vmatpush.bf16.msra.mxu0 %v579
        %676 = vmatpush.bf16.msra.mxu0 %v575
        %677 = vmatpush.bf16.msra.mxu0 %v571
        %678 = vmatpush.bf16.msra.mxu0 %v567
        %679 = vmatpush.bf16.msra.mxu0 %v563
        %680 = vmatmul.bf16.gmra.mxu0 %v336
        %v681 = vpop.f32.mrf.mxu0
        %v682 = vadd.f32 %v669, %v681
        %v683 = vpop.f32.mrf.mxu0
        %684 = vdwg.mxu0
        %685 = vmatpush.bf16.msra.mxu0 %v560
        %686 = vmatpush.bf16.msra.mxu0 %v556
        %687 = vmatpush.bf16.msra.mxu0 %v552
        %688 = vmatpush.bf16.msra.mxu0 %v548
        %689 = vmatpush.bf16.msra.mxu0 %v544
        %690 = vmatpush.bf16.msra.mxu0 %v540
        %691 = vmatpush.bf16.msra.mxu0 %v536
        %692 = vmatpush.bf16.msra.mxu0 %v532
        %693 = vmatmul.bf16.gmra.mxu0 %v335
        %v694 = vpop.f32.mrf.mxu0
        %v695 = vadd.f32 0.0, %v694
        %v696 = vpop.f32.mrf.mxu0
        %697 = vdwg.mxu0
        %698 = vmatpush.bf16.msra.mxu0 %v592
        %699 = vmatpush.bf16.msra.mxu0 %v588
        %700 = vmatpush.bf16.msra.mxu0 %v584
        %701 = vmatpush.bf16.msra.mxu0 %v580
        %702 = vmatpush.bf16.msra.mxu0 %v576
        %703 = vmatpush.bf16.msra.mxu0 %v572
        %704 = vmatpush.bf16.msra.mxu0 %v568
        %705 = vmatpush.bf16.msra.mxu0 %v564
        %706 = vmatmul.bf16.gmra.mxu0 %v336
        %v707 = vpop.f32.mrf.mxu0
        %v708 = vadd.f32 %v695, %v707
        %v709 = vpop.f32.mrf.mxu0
        %710 = vdwg.mxu0
        %711 = vmatpush.bf16.msra.mxu0 %v561
        %712 = vmatpush.bf16.msra.mxu0 %v557
        %713 = vmatpush.bf16.msra.mxu0 %v553
        %714 = vmatpush.bf16.msra.mxu0 %v549
        %715 = vmatpush.bf16.msra.mxu0 %v545
        %716 = vmatpush.bf16.msra.mxu0 %v541
        %717 = vmatpush.bf16.msra.mxu0 %v537
        %718 = vmatpush.bf16.msra.mxu0 %v533
        %719 = vmatmul.bf16.gmra.mxu0 %v335
        %v720 = vpop.f32.mrf.mxu0
        %v721 = vadd.f32 0.0, %v720
        %v722 = vpop.f32.mrf.mxu0
        %723 = vdwg.mxu0
        %724 = vmatpush.bf16.msra.mxu0 %v593
        %725 = vmatpush.bf16.msra.mxu0 %v589
        %726 = vmatpush.bf16.msra.mxu0 %v585
        %727 = vmatpush.bf16.msra.mxu0 %v581
        %728 = vmatpush.bf16.msra.mxu0 %v577
        %729 = vmatpush.bf16.msra.mxu0 %v573
        %730 = vmatpush.bf16.msra.mxu0 %v569
        %731 = vmatpush.bf16.msra.mxu0 %v565
        %732 = vmatmul.bf16.gmra.mxu0 %v336
        %v733 = vpop.f32.mrf.mxu0
        %v734 = vadd.f32 %v721, %v733
        %v735 = vpop.f32.mrf.mxu0
        %736 = vdwg.mxu0
        %737 = vmatpush.bf16.msra.mxu0 %v562
        %738 = vmatpush.bf16.msra.mxu0 %v558
        %739 = vmatpush.bf16.msra.mxu0 %v554
        %740 = vmatpush.bf16.msra.mxu0 %v550
        %741 = vmatpush.bf16.msra.mxu0 %v546
        %742 = vmatpush.bf16.msra.mxu0 %v542
        %743 = vmatpush.bf16.msra.mxu0 %v538
        %744 = vmatpush.bf16.msra.mxu0 %v534
        %745 = vmatmul.bf16.gmra.mxu0 %v335
        %v746 = vpop.f32.mrf.mxu0
        %v747 = vadd.f32 0.0, %v746
        %v748 = vpop.f32.mrf.mxu0
        %749 = vdwg.mxu0
        %750 = vmatpush.bf16.msra.mxu0 %v594
        %751 = vmatpush.bf16.msra.mxu0 %v590
        %752 = vmatpush.bf16.msra.mxu0 %v586
        %753 = vmatpush.bf16.msra.mxu0 %v582
        %754 = vmatpush.bf16.msra.mxu0 %v578
        %755 = vmatpush.bf16.msra.mxu0 %v574
        %756 = vmatpush.bf16.msra.mxu0 %v570
        %757 = vmatpush.bf16.msra.mxu0 %v566
        %758 = vmatmul.bf16.gmra.mxu0 %v336
        %v759 = vpop.f32.mrf.mxu0
        %v760 = vadd.f32 %v747, %v759
        %v761 = vpop.f32.mrf.mxu0
        %762 = vdwg.mxu0
        %s763 = scalar_lea.vmem %s225, 512 [#allocation6]
        %v764 = vld [vmem:[%s763] sm:$0xff]
        %v765 = vld [vmem:[%s763 + $0x8] sm:$0xff]
        %v766 = vld [vmem:[%s763 + $0x10] sm:$0xff]
        %v767 = vld [vmem:[%s763 + $0x18] sm:$0xff]
        %v768 = vld [vmem:[%s763 + $0x20] sm:$0xff]
        %v769 = vld [vmem:[%s763 + $0x28] sm:$0xff]
        %v770 = vld [vmem:[%s763 + $0x30] sm:$0xff]
        %v771 = vld [vmem:[%s763 + $0x38] sm:$0xff]
        %v772 = vld [vmem:[%s763 + $0x40] sm:$0xff]
        %v773 = vld [vmem:[%s763 + $0x48] sm:$0xff]
        %v774 = vld [vmem:[%s763 + $0x50] sm:$0xff]
        %v775 = vld [vmem:[%s763 + $0x58] sm:$0xff]
        %v776 = vld [vmem:[%s763 + $0x60] sm:$0xff]
        %v777 = vld [vmem:[%s763 + $0x68] sm:$0xff]
        %v778 = vld [vmem:[%s763 + $0x70] sm:$0xff]
        %v779 = vld [vmem:[%s763 + $0x78] sm:$0xff]
        %v780 = vld [vmem:[%s763 + $0x80] sm:$0xff]
        %v781 = vld [vmem:[%s763 + $0x88] sm:$0xff]
        %v782 = vld [vmem:[%s763 + $0x90] sm:$0xff]
        %v783 = vld [vmem:[%s763 + $0x98] sm:$0xff]
        %v784 = vld [vmem:[%s763 + $0xa0] sm:$0xff]
        %v785 = vld [vmem:[%s763 + $0xa8] sm:$0xff]
        %v786 = vld [vmem:[%s763 + $0xb0] sm:$0xff]
        %v787 = vld [vmem:[%s763 + $0xb8] sm:$0xff]
        %v788 = vld [vmem:[%s763 + $0xc0] sm:$0xff]
        %v789 = vld [vmem:[%s763 + $0xc8] sm:$0xff]
        %v790 = vld [vmem:[%s763 + $0xd0] sm:$0xff]
        %v791 = vld [vmem:[%s763 + $0xd8] sm:$0xff]
        %v792 = vld [vmem:[%s763 + $0xe0] sm:$0xff]
        %v793 = vld [vmem:[%s763 + $0xe8] sm:$0xff]
        %v794 = vld [vmem:[%s763 + $0xf0] sm:$0xff]
        %v795 = vld [vmem:[%s763 + $0xf8] sm:$0xff]
        %v796 = vld [vmem:[%s763 + $0x100] sm:$0xff]
        %v797 = vld [vmem:[%s763 + $0x108] sm:$0xff]
        %v798 = vld [vmem:[%s763 + $0x110] sm:$0xff]
        %v799 = vld [vmem:[%s763 + $0x118] sm:$0xff]
        %v800 = vld [vmem:[%s763 + $0x120] sm:$0xff]
        %v801 = vld [vmem:[%s763 + $0x128] sm:$0xff]
        %v802 = vld [vmem:[%s763 + $0x130] sm:$0xff]
        %v803 = vld [vmem:[%s763 + $0x138] sm:$0xff]
        %v804 = vld [vmem:[%s763 + $0x140] sm:$0xff]
        %v805 = vld [vmem:[%s763 + $0x148] sm:$0xff]
        %v806 = vld [vmem:[%s763 + $0x150] sm:$0xff]
        %v807 = vld [vmem:[%s763 + $0x158] sm:$0xff]
        %v808 = vld [vmem:[%s763 + $0x160] sm:$0xff]
        %v809 = vld [vmem:[%s763 + $0x168] sm:$0xff]
        %v810 = vld [vmem:[%s763 + $0x170] sm:$0xff]
        %v811 = vld [vmem:[%s763 + $0x178] sm:$0xff]
        %v812 = vld [vmem:[%s763 + $0x180] sm:$0xff]
        %v813 = vld [vmem:[%s763 + $0x188] sm:$0xff]
        %v814 = vld [vmem:[%s763 + $0x190] sm:$0xff]
        %v815 = vld [vmem:[%s763 + $0x198] sm:$0xff]
        %v816 = vld [vmem:[%s763 + $0x1a0] sm:$0xff]
        %v817 = vld [vmem:[%s763 + $0x1a8] sm:$0xff]
        %v818 = vld [vmem:[%s763 + $0x1b0] sm:$0xff]
        %v819 = vld [vmem:[%s763 + $0x1b8] sm:$0xff]
        %v820 = vld [vmem:[%s763 + $0x1c0] sm:$0xff]
        %v821 = vld [vmem:[%s763 + $0x1c8] sm:$0xff]
        %v822 = vld [vmem:[%s763 + $0x1d0] sm:$0xff]
        %v823 = vld [vmem:[%s763 + $0x1d8] sm:$0xff]
        %v824 = vld [vmem:[%s763 + $0x1e0] sm:$0xff]
        %v825 = vld [vmem:[%s763 + $0x1e8] sm:$0xff]
        %v826 = vld [vmem:[%s763 + $0x1f0] sm:$0xff]
        %v827 = vld [vmem:[%s763 + $0x1f8] sm:$0xff]
        %v892 = vunpack.c.l.b16 %v764
        %v893 = vunpack.c.h.b16 %v764
        %v894 = vunpack.c.l.b16 %v765
        %v895 = vunpack.c.h.b16 %v765
        %v896 = vunpack.c.l.b16 %v766
        %v897 = vunpack.c.h.b16 %v766
        %v898 = vunpack.c.l.b16 %v767
        %v899 = vunpack.c.h.b16 %v767
        %v900 = vunpack.c.l.b16 %v768
        %v901 = vunpack.c.h.b16 %v768
        %v902 = vunpack.c.l.b16 %v769
        %v903 = vunpack.c.h.b16 %v769
        %v904 = vunpack.c.l.b16 %v770
        %v905 = vunpack.c.h.b16 %v770
        %v906 = vunpack.c.l.b16 %v771
        %v907 = vunpack.c.h.b16 %v771
        %v908 = vunpack.c.l.b16 %v772
        %v909 = vunpack.c.h.b16 %v772
        %v910 = vunpack.c.l.b16 %v773
        %v911 = vunpack.c.h.b16 %v773
        %v912 = vunpack.c.l.b16 %v774
        %v913 = vunpack.c.h.b16 %v774
        %v914 = vunpack.c.l.b16 %v775
        %v915 = vunpack.c.h.b16 %v775
        %v916 = vunpack.c.l.b16 %v776
        %v917 = vunpack.c.h.b16 %v776
        %v918 = vunpack.c.l.b16 %v777
        %v919 = vunpack.c.h.b16 %v777
        %v920 = vunpack.c.l.b16 %v778
        %v921 = vunpack.c.h.b16 %v778
        %v922 = vunpack.c.l.b16 %v779
        %v923 = vunpack.c.h.b16 %v779
        %v924 = vunpack.c.l.b16 %v780
        %v925 = vunpack.c.h.b16 %v780
        %v926 = vunpack.c.l.b16 %v781
        %v927 = vunpack.c.h.b16 %v781
        %v928 = vunpack.c.l.b16 %v782
        %v929 = vunpack.c.h.b16 %v782
        %v930 = vunpack.c.l.b16 %v783
        %v931 = vunpack.c.h.b16 %v783
        %v932 = vunpack.c.l.b16 %v784
        %v933 = vunpack.c.h.b16 %v784
        %v934 = vunpack.c.l.b16 %v785
        %v935 = vunpack.c.h.b16 %v785
        %v936 = vunpack.c.l.b16 %v786
        %v937 = vunpack.c.h.b16 %v786
        %v938 = vunpack.c.l.b16 %v787
        %v939 = vunpack.c.h.b16 %v787
        %v940 = vunpack.c.l.b16 %v788
        %v941 = vunpack.c.h.b16 %v788
        %v942 = vunpack.c.l.b16 %v789
        %v943 = vunpack.c.h.b16 %v789
        %v944 = vunpack.c.l.b16 %v790
        %v945 = vunpack.c.h.b16 %v790
        %v946 = vunpack.c.l.b16 %v791
        %v947 = vunpack.c.h.b16 %v791
        %v948 = vunpack.c.l.b16 %v792
        %v949 = vunpack.c.h.b16 %v792
        %v950 = vunpack.c.l.b16 %v793
        %v951 = vunpack.c.h.b16 %v793
        %v952 = vunpack.c.l.b16 %v794
        %v953 = vunpack.c.h.b16 %v794
        %v954 = vunpack.c.l.b16 %v795
        %v955 = vunpack.c.h.b16 %v795
        %v956 = vunpack.c.l.b16 %v796
        %v957 = vunpack.c.h.b16 %v796
        %v958 = vunpack.c.l.b16 %v797
        %v959 = vunpack.c.h.b16 %v797
        %v960 = vunpack.c.l.b16 %v798
        %v961 = vunpack.c.h.b16 %v798
        %v962 = vunpack.c.l.b16 %v799
        %v963 = vunpack.c.h.b16 %v799
        %v964 = vunpack.c.l.b16 %v800
        %v965 = vunpack.c.h.b16 %v800
        %v966 = vunpack.c.l.b16 %v801
        %v967 = vunpack.c.h.b16 %v801
        %v968 = vunpack.c.l.b16 %v802
        %v969 = vunpack.c.h.b16 %v802
        %v970 = vunpack.c.l.b16 %v803
        %v971 = vunpack.c.h.b16 %v803
        %v972 = vunpack.c.l.b16 %v804
        %v973 = vunpack.c.h.b16 %v804
        %v974 = vunpack.c.l.b16 %v805
        %v975 = vunpack.c.h.b16 %v805
        %v976 = vunpack.c.l.b16 %v806
        %v977 = vunpack.c.h.b16 %v806
        %v978 = vunpack.c.l.b16 %v807
        %v979 = vunpack.c.h.b16 %v807
        %v980 = vunpack.c.l.b16 %v808
        %v981 = vunpack.c.h.b16 %v808
        %v982 = vunpack.c.l.b16 %v809
        %v983 = vunpack.c.h.b16 %v809
        %v984 = vunpack.c.l.b16 %v810
        %v985 = vunpack.c.h.b16 %v810
        %v986 = vunpack.c.l.b16 %v811
        %v987 = vunpack.c.h.b16 %v811
        %v988 = vunpack.c.l.b16 %v812
        %v989 = vunpack.c.h.b16 %v812
        %v990 = vunpack.c.l.b16 %v813
        %v991 = vunpack.c.h.b16 %v813
        %v992 = vunpack.c.l.b16 %v814
        %v993 = vunpack.c.h.b16 %v814
        %v994 = vunpack.c.l.b16 %v815
        %v995 = vunpack.c.h.b16 %v815
        %v996 = vunpack.c.l.b16 %v816
        %v997 = vunpack.c.h.b16 %v816
        %v998 = vunpack.c.l.b16 %v817
        %v999 = vunpack.c.h.b16 %v817
        %v1000 = vunpack.c.l.b16 %v818
        %v1001 = vunpack.c.h.b16 %v818
        %v1002 = vunpack.c.l.b16 %v819
        %v1003 = vunpack.c.h.b16 %v819
        %v1004 = vunpack.c.l.b16 %v820
        %v1005 = vunpack.c.h.b16 %v820
        %v1006 = vunpack.c.l.b16 %v821
        %v1007 = vunpack.c.h.b16 %v821
        %v1008 = vunpack.c.l.b16 %v822
        %v1009 = vunpack.c.h.b16 %v822
        %v1010 = vunpack.c.l.b16 %v823
        %v1011 = vunpack.c.h.b16 %v823
        %v1012 = vunpack.c.l.b16 %v824
        %v1013 = vunpack.c.h.b16 %v824
        %v1014 = vunpack.c.l.b16 %v825
        %v1015 = vunpack.c.h.b16 %v825
        %v1016 = vunpack.c.l.b16 %v826
        %v1017 = vunpack.c.h.b16 %v826
        %v1018 = vunpack.c.l.b16 %v827
        %v1019 = vunpack.c.h.b16 %v827
        %v1020 = vpack.c.b16 %v896, %v892
        %v1021 = vpack.c.b16 %v897, %v893
        %v1022 = vpack.c.b16 %v898, %v894
        %v1023 = vpack.c.b16 %v899, %v895
        %v1024 = vpack.c.b16 %v904, %v900
        %v1025 = vpack.c.b16 %v905, %v901
        %v1026 = vpack.c.b16 %v906, %v902
        %v1027 = vpack.c.b16 %v907, %v903
        %v1028 = vpack.c.b16 %v912, %v908
        %v1029 = vpack.c.b16 %v913, %v909
        %v1030 = vpack.c.b16 %v914, %v910
        %v1031 = vpack.c.b16 %v915, %v911
        %v1032 = vpack.c.b16 %v920, %v916
        %v1033 = vpack.c.b16 %v921, %v917
        %v1034 = vpack.c.b16 %v922, %v918
        %v1035 = vpack.c.b16 %v923, %v919
        %v1036 = vpack.c.b16 %v928, %v924
        %v1037 = vpack.c.b16 %v929, %v925
        %v1038 = vpack.c.b16 %v930, %v926
        %v1039 = vpack.c.b16 %v931, %v927
        %v1040 = vpack.c.b16 %v936, %v932
        %v1041 = vpack.c.b16 %v937, %v933
        %v1042 = vpack.c.b16 %v938, %v934
        %v1043 = vpack.c.b16 %v939, %v935
        %v1044 = vpack.c.b16 %v944, %v940
        %v1045 = vpack.c.b16 %v945, %v941
        %v1046 = vpack.c.b16 %v946, %v942
        %v1047 = vpack.c.b16 %v947, %v943
        %v1048 = vpack.c.b16 %v952, %v948
        %v1049 = vpack.c.b16 %v953, %v949
        %v1050 = vpack.c.b16 %v954, %v950
        %v1051 = vpack.c.b16 %v955, %v951
        %v1052 = vpack.c.b16 %v960, %v956
        %v1053 = vpack.c.b16 %v961, %v957
        %v1054 = vpack.c.b16 %v962, %v958
        %v1055 = vpack.c.b16 %v963, %v959
        %v1056 = vpack.c.b16 %v968, %v964
        %v1057 = vpack.c.b16 %v969, %v965
        %v1058 = vpack.c.b16 %v970, %v966
        %v1059 = vpack.c.b16 %v971, %v967
        %v1060 = vpack.c.b16 %v976, %v972
        %v1061 = vpack.c.b16 %v977, %v973
        %v1062 = vpack.c.b16 %v978, %v974
        %v1063 = vpack.c.b16 %v979, %v975
        %v1064 = vpack.c.b16 %v984, %v980
        %v1065 = vpack.c.b16 %v985, %v981
        %v1066 = vpack.c.b16 %v986, %v982
        %v1067 = vpack.c.b16 %v987, %v983
        %v1068 = vpack.c.b16 %v992, %v988
        %v1069 = vpack.c.b16 %v993, %v989
        %v1070 = vpack.c.b16 %v994, %v990
        %v1071 = vpack.c.b16 %v995, %v991
        %v1072 = vpack.c.b16 %v1000, %v996
        %v1073 = vpack.c.b16 %v1001, %v997
        %v1074 = vpack.c.b16 %v1002, %v998
        %v1075 = vpack.c.b16 %v1003, %v999
        %v1076 = vpack.c.b16 %v1008, %v1004
        %v1077 = vpack.c.b16 %v1009, %v1005
        %v1078 = vpack.c.b16 %v1010, %v1006
        %v1079 = vpack.c.b16 %v1011, %v1007
        %v1080 = vpack.c.b16 %v1016, %v1012
        %v1081 = vpack.c.b16 %v1017, %v1013
        %v1082 = vpack.c.b16 %v1018, %v1014
        %v1083 = vpack.c.b16 %v1019, %v1015
        %1148 = vmatpush.bf16.msra.mxu0 %v1048
        %1149 = vmatpush.bf16.msra.mxu0 %v1044
        %1150 = vmatpush.bf16.msra.mxu0 %v1040
        %1151 = vmatpush.bf16.msra.mxu0 %v1036
        %1152 = vmatpush.bf16.msra.mxu0 %v1032
        %1153 = vmatpush.bf16.msra.mxu0 %v1028
        %1154 = vmatpush.bf16.msra.mxu0 %v1024
        %1155 = vmatpush.bf16.msra.mxu0 %v1020
        %1156 = vmatmul.bf16.gmra.mxu0 %v335
        %v1157 = vpop.f32.mrf.mxu0
        %v1158 = vadd.f32 0.0, %v1157
        %v1159 = vpop.f32.mrf.mxu0
        %1160 = vdwg.mxu0
        %1161 = vmatpush.bf16.msra.mxu0 %v1080
        %1162 = vmatpush.bf16.msra.mxu0 %v1076
        %1163 = vmatpush.bf16.msra.mxu0 %v1072
        %1164 = vmatpush.bf16.msra.mxu0 %v1068
        %1165 = vmatpush.bf16.msra.mxu0 %v1064
        %1166 = vmatpush.bf16.msra.mxu0 %v1060
        %1167 = vmatpush.bf16.msra.mxu0 %v1056
        %1168 = vmatpush.bf16.msra.mxu0 %v1052
        %1169 = vmatmul.bf16.gmra.mxu0 %v336
        %v1170 = vpop.f32.mrf.mxu0
        %v1171 = vadd.f32 %v1158, %v1170
        %v1172 = vpop.f32.mrf.mxu0
        %1173 = vdwg.mxu0
        %1174 = vmatpush.bf16.msra.mxu0 %v1049
        %1175 = vmatpush.bf16.msra.mxu0 %v1045
        %1176 = vmatpush.bf16.msra.mxu0 %v1041
        %1177 = vmatpush.bf16.msra.mxu0 %v1037
        %1178 = vmatpush.bf16.msra.mxu0 %v1033
        %1179 = vmatpush.bf16.msra.mxu0 %v1029
        %1180 = vmatpush.bf16.msra.mxu0 %v1025
        %1181 = vmatpush.bf16.msra.mxu0 %v1021
        %1182 = vmatmul.bf16.gmra.mxu0 %v335
        %v1183 = vpop.f32.mrf.mxu0
        %v1184 = vadd.f32 0.0, %v1183
        %v1185 = vpop.f32.mrf.mxu0
        %1186 = vdwg.mxu0
        %1187 = vmatpush.bf16.msra.mxu0 %v1081
        %1188 = vmatpush.bf16.msra.mxu0 %v1077
        %1189 = vmatpush.bf16.msra.mxu0 %v1073
        %1190 = vmatpush.bf16.msra.mxu0 %v1069
        %1191 = vmatpush.bf16.msra.mxu0 %v1065
        %1192 = vmatpush.bf16.msra.mxu0 %v1061
        %1193 = vmatpush.bf16.msra.mxu0 %v1057
        %1194 = vmatpush.bf16.msra.mxu0 %v1053
        %1195 = vmatmul.bf16.gmra.mxu0 %v336
        %v1196 = vpop.f32.mrf.mxu0
        %v1197 = vadd.f32 %v1184, %v1196
        %v1198 = vpop.f32.mrf.mxu0
        %1199 = vdwg.mxu0
        %1200 = vmatpush.bf16.msra.mxu0 %v1050
        %1201 = vmatpush.bf16.msra.mxu0 %v1046
        %1202 = vmatpush.bf16.msra.mxu0 %v1042
        %1203 = vmatpush.bf16.msra.mxu0 %v1038
        %1204 = vmatpush.bf16.msra.mxu0 %v1034
        %1205 = vmatpush.bf16.msra.mxu0 %v1030
        %1206 = vmatpush.bf16.msra.mxu0 %v1026
        %1207 = vmatpush.bf16.msra.mxu0 %v1022
        %1208 = vmatmul.bf16.gmra.mxu0 %v335
        %v1209 = vpop.f32.mrf.mxu0
        %v1210 = vadd.f32 0.0, %v1209
        %v1211 = vpop.f32.mrf.mxu0
        %1212 = vdwg.mxu0
        %1213 = vmatpush.bf16.msra.mxu0 %v1082
        %1214 = vmatpush.bf16.msra.mxu0 %v1078
        %1215 = vmatpush.bf16.msra.mxu0 %v1074
        %1216 = vmatpush.bf16.msra.mxu0 %v1070
        %1217 = vmatpush.bf16.msra.mxu0 %v1066
        %1218 = vmatpush.bf16.msra.mxu0 %v1062
        %1219 = vmatpush.bf16.msra.mxu0 %v1058
        %1220 = vmatpush.bf16.msra.mxu0 %v1054
        %1221 = vmatmul.bf16.gmra.mxu0 %v336
        %v1222 = vpop.f32.mrf.mxu0
        %v1223 = vadd.f32 %v1210, %v1222
        %v1224 = vpop.f32.mrf.mxu0
        %1225 = vdwg.mxu0
        %1226 = vmatpush.bf16.msra.mxu0 %v1051
        %1227 = vmatpush.bf16.msra.mxu0 %v1047
        %1228 = vmatpush.bf16.msra.mxu0 %v1043
        %1229 = vmatpush.bf16.msra.mxu0 %v1039
        %1230 = vmatpush.bf16.msra.mxu0 %v1035
        %1231 = vmatpush.bf16.msra.mxu0 %v1031
        %1232 = vmatpush.bf16.msra.mxu0 %v1027
        %1233 = vmatpush.bf16.msra.mxu0 %v1023
        %1234 = vmatmul.bf16.gmra.mxu0 %v335
        %v1235 = vpop.f32.mrf.mxu0
        %v1236 = vadd.f32 0.0, %v1235
        %v1237 = vpop.f32.mrf.mxu0
        %1238 = vdwg.mxu0
        %1239 = vmatpush.bf16.msra.mxu0 %v1083
        %1240 = vmatpush.bf16.msra.mxu0 %v1079
        %1241 = vmatpush.bf16.msra.mxu0 %v1075
        %1242 = vmatpush.bf16.msra.mxu0 %v1071
        %1243 = vmatpush.bf16.msra.mxu0 %v1067
        %1244 = vmatpush.bf16.msra.mxu0 %v1063
        %1245 = vmatpush.bf16.msra.mxu0 %v1059
        %1246 = vmatpush.bf16.msra.mxu0 %v1055
        %1247 = vmatmul.bf16.gmra.mxu0 %v336
        %v1248 = vpop.f32.mrf.mxu0
        %v1249 = vadd.f32 %v1236, %v1248
        %v1250 = vpop.f32.mrf.mxu0
        %1251 = vdwg.mxu0
        %v1252 = vxor.u32 %v682, 2147483648
        %v1253 = vxor.u32 %v708, 2147483648
        %v1254 = vxor.u32 %v734, 2147483648
        %v1255 = vxor.u32 %v760, 2147483648
        %v1256 = vmul.f32 %v1252, 1.442695
        %v1257 = vpow.pop %v1256
        %v1258 = vmul.f32 %v1253, 1.442695
        %v1259 = vpow.pop %v1258
        %v1260 = vmul.f32 %v1254, 1.442695
        %v1261 = vpow.pop %v1260
        %v1262 = vmul.f32 %v1255, 1.442695
        %v1263 = vpow.pop %v1262
        %v1264 = vadd.f32 %v1257, 1.0
        %v1265 = vadd.f32 %v1259, 1.0
        %v1266 = vadd.f32 %v1261, 1.0
        %v1267 = vadd.f32 %v1263, 1.0
        %v1268 = vrcp.pop %v1264
        %v1269 = vmul.f32 %v1264, %v1268
        %v1270 = vsub.f32 1.0, %v1269
        %v1271 = vmul.f32 %v1268, %v1270
        %v1272 = vadd.f32 %v1268, %v1271
        %vm1273 = vweird.f32 %v1264
        %vm1274 = vweird.f32 %v1268
        %vm1275 = vmor %vm1273, %vm1274
        %v1276 = vsel %vm1275, %v1268, %v1272
        %v1277 = vand.u32 2147483647, %v1264
        %vm1278 = vcmp.eq.f32.partialorder %v1277, 8.507059e+37
        %v1279 = vand.u32 %v1264, 2147483648
        %v1280 = vor.u32 1.1754944e-38, %v1279
        %v1281 = vsel %vm1278, %v1280, %v1276
        %v1282 = vmul.f32 1.0, %v1281
        %v1283 = vrcp.pop %v1265
        %v1284 = vmul.f32 %v1265, %v1283
        %v1285 = vsub.f32 1.0, %v1284
        %v1286 = vmul.f32 %v1283, %v1285
        %v1287 = vadd.f32 %v1283, %v1286
        %vm1288 = vweird.f32 %v1265
        %vm1289 = vweird.f32 %v1283
        %vm1290 = vmor %vm1288, %vm1289
        %v1291 = vsel %vm1290, %v1283, %v1287
        %v1292 = vand.u32 2147483647, %v1265
        %vm1293 = vcmp.eq.f32.partialorder %v1292, 8.507059e+37
        %v1294 = vand.u32 %v1265, 2147483648
        %v1295 = vor.u32 1.1754944e-38, %v1294
        %v1296 = vsel %vm1293, %v1295, %v1291
        %v1297 = vmul.f32 1.0, %v1296
        %v1298 = vrcp.pop %v1266
        %v1299 = vmul.f32 %v1266, %v1298
        %v1300 = vsub.f32 1.0, %v1299
        %v1301 = vmul.f32 %v1298, %v1300
        %v1302 = vadd.f32 %v1298, %v1301
        %vm1303 = vweird.f32 %v1266
        %vm1304 = vweird.f32 %v1298
        %vm1305 = vmor %vm1303, %vm1304
        %v1306 = vsel %vm1305, %v1298, %v1302
        %v1307 = vand.u32 2147483647, %v1266
        %vm1308 = vcmp.eq.f32.partialorder %v1307, 8.507059e+37
        %v1309 = vand.u32 %v1266, 2147483648
        %v1310 = vor.u32 1.1754944e-38, %v1309
        %v1311 = vsel %vm1308, %v1310, %v1306
        %v1312 = vmul.f32 1.0, %v1311
        %v1313 = vrcp.pop %v1267
        %v1314 = vmul.f32 %v1267, %v1313
        %v1315 = vsub.f32 1.0, %v1314
        %v1316 = vmul.f32 %v1313, %v1315
        %v1317 = vadd.f32 %v1313, %v1316
        %vm1318 = vweird.f32 %v1267
        %vm1319 = vweird.f32 %v1313
        %vm1320 = vmor %vm1318, %vm1319
        %v1321 = vsel %vm1320, %v1313, %v1317
        %v1322 = vand.u32 2147483647, %v1267
        %vm1323 = vcmp.eq.f32.partialorder %v1322, 8.507059e+37
        %v1324 = vand.u32 %v1267, 2147483648
        %v1325 = vor.u32 1.1754944e-38, %v1324
        %v1326 = vsel %vm1323, %v1325, %v1321
        %v1327 = vmul.f32 1.0, %v1326
        %v1328 = vmul.f32 %v682, %v1282
        %v1329 = vmul.f32 %v708, %v1297
        %v1330 = vmul.f32 %v734, %v1312
        %v1331 = vmul.f32 %v760, %v1327
        %v1332 = vmul.f32 %v1328, %v1171
        %v1333 = vmul.f32 %v1329, %v1197
        %v1334 = vmul.f32 %v1330, %v1223
        %v1335 = vmul.f32 %v1331, %v1249
        %v1336 = vld [vmem:[#allocation2] sm:$0xff]
        %v1337 = vld [vmem:[#allocation2 + $0x8] sm:$0xff]
        %v1338 = vpack.c.bf16 %v1332, %v1332
        %v1339 = vpack.c.bf16 %v1333, %v1333
        %v1340 = vpack.c.bf16 %v1334, %v1334
        %v1341 = vpack.c.bf16 %v1335, %v1335
        %v1342 = vld [vmem:[%s235] sm:$0xff]
        %v1343 = vld [vmem:[%s235 + $0x8] sm:$0xff]
        %v1344 = vld [vmem:[%s235 + $0x10] sm:$0xff]
        %v1345 = vld [vmem:[%s235 + $0x18] sm:$0xff]
        %v1346 = vld [vmem:[%s235 + $0x20] sm:$0xff]
        %v1347 = vld [vmem:[%s235 + $0x28] sm:$0xff]
        %v1348 = vld [vmem:[%s235 + $0x30] sm:$0xff]
        %v1349 = vld [vmem:[%s235 + $0x38] sm:$0xff]
        %v1350 = vld [vmem:[%s235 + $0x40] sm:$0xff]
        %v1351 = vld [vmem:[%s235 + $0x48] sm:$0xff]
        %v1352 = vld [vmem:[%s235 + $0x50] sm:$0xff]
        %v1353 = vld [vmem:[%s235 + $0x58] sm:$0xff]
        %v1354 = vld [vmem:[%s235 + $0x60] sm:$0xff]
        %v1355 = vld [vmem:[%s235 + $0x68] sm:$0xff]
        %v1356 = vld [vmem:[%s235 + $0x70] sm:$0xff]
        %v1357 = vld [vmem:[%s235 + $0x78] sm:$0xff]
        %v1358 = vld [vmem:[%s235 + $0x80] sm:$0xff]
        %v1359 = vld [vmem:[%s235 + $0x88] sm:$0xff]
        %v1360 = vld [vmem:[%s235 + $0x90] sm:$0xff]
        %v1361 = vld [vmem:[%s235 + $0x98] sm:$0xff]
        %v1362 = vld [vmem:[%s235 + $0xa0] sm:$0xff]
        %v1363 = vld [vmem:[%s235 + $0xa8] sm:$0xff]
        %v1364 = vld [vmem:[%s235 + $0xb0] sm:$0xff]
        %v1365 = vld [vmem:[%s235 + $0xb8] sm:$0xff]
        %v1366 = vld [vmem:[%s235 + $0xc0] sm:$0xff]
        %v1367 = vld [vmem:[%s235 + $0xc8] sm:$0xff]
        %v1368 = vld [vmem:[%s235 + $0xd0] sm:$0xff]
        %v1369 = vld [vmem:[%s235 + $0xd8] sm:$0xff]
        %v1370 = vld [vmem:[%s235 + $0xe0] sm:$0xff]
        %v1371 = vld [vmem:[%s235 + $0xe8] sm:$0xff]
        %v1372 = vld [vmem:[%s235 + $0xf0] sm:$0xff]
        %v1373 = vld [vmem:[%s235 + $0xf8] sm:$0xff]
        %v1374 = vld [vmem:[%s235 + $0x100] sm:$0xff]
        %v1375 = vld [vmem:[%s235 + $0x108] sm:$0xff]
        %v1376 = vld [vmem:[%s235 + $0x110] sm:$0xff]
        %v1377 = vld [vmem:[%s235 + $0x118] sm:$0xff]
        %v1378 = vld [vmem:[%s235 + $0x120] sm:$0xff]
        %v1379 = vld [vmem:[%s235 + $0x128] sm:$0xff]
        %v1380 = vld [vmem:[%s235 + $0x130] sm:$0xff]
        %v1381 = vld [vmem:[%s235 + $0x138] sm:$0xff]
        %v1382 = vld [vmem:[%s235 + $0x140] sm:$0xff]
        %v1383 = vld [vmem:[%s235 + $0x148] sm:$0xff]
        %v1384 = vld [vmem:[%s235 + $0x150] sm:$0xff]
        %v1385 = vld [vmem:[%s235 + $0x158] sm:$0xff]
        %v1386 = vld [vmem:[%s235 + $0x160] sm:$0xff]
        %v1387 = vld [vmem:[%s235 + $0x168] sm:$0xff]
        %v1388 = vld [vmem:[%s235 + $0x170] sm:$0xff]
        %v1389 = vld [vmem:[%s235 + $0x178] sm:$0xff]
        %v1390 = vld [vmem:[%s235 + $0x180] sm:$0xff]
        %v1391 = vld [vmem:[%s235 + $0x188] sm:$0xff]
        %v1392 = vld [vmem:[%s235 + $0x190] sm:$0xff]
        %v1393 = vld [vmem:[%s235 + $0x198] sm:$0xff]
        %v1394 = vld [vmem:[%s235 + $0x1a0] sm:$0xff]
        %v1395 = vld [vmem:[%s235 + $0x1a8] sm:$0xff]
        %v1396 = vld [vmem:[%s235 + $0x1b0] sm:$0xff]
        %v1397 = vld [vmem:[%s235 + $0x1b8] sm:$0xff]
        %v1398 = vld [vmem:[%s235 + $0x1c0] sm:$0xff]
        %v1399 = vld [vmem:[%s235 + $0x1c8] sm:$0xff]
        %v1400 = vld [vmem:[%s235 + $0x1d0] sm:$0xff]
        %v1401 = vld [vmem:[%s235 + $0x1d8] sm:$0xff]
        %v1402 = vld [vmem:[%s235 + $0x1e0] sm:$0xff]
        %v1403 = vld [vmem:[%s235 + $0x1e8] sm:$0xff]
        %v1404 = vld [vmem:[%s235 + $0x1f0] sm:$0xff]
        %v1405 = vld [vmem:[%s235 + $0x1f8] sm:$0xff]
        %v1470 = vunpack.c.l.b16 %v1342
        %v1471 = vunpack.c.h.b16 %v1342
        %v1472 = vunpack.c.l.b16 %v1343
        %v1473 = vunpack.c.h.b16 %v1343
        %v1474 = vunpack.c.l.b16 %v1344
        %v1475 = vunpack.c.h.b16 %v1344
        %v1476 = vunpack.c.l.b16 %v1345
        %v1477 = vunpack.c.h.b16 %v1345
        %v1478 = vunpack.c.l.b16 %v1346
        %v1479 = vunpack.c.h.b16 %v1346
        %v1480 = vunpack.c.l.b16 %v1347
        %v1481 = vunpack.c.h.b16 %v1347
        %v1482 = vunpack.c.l.b16 %v1348
        %v1483 = vunpack.c.h.b16 %v1348
        %v1484 = vunpack.c.l.b16 %v1349
        %v1485 = vunpack.c.h.b16 %v1349
        %v1486 = vunpack.c.l.b16 %v1350
        %v1487 = vunpack.c.h.b16 %v1350
        %v1488 = vunpack.c.l.b16 %v1351
        %v1489 = vunpack.c.h.b16 %v1351
        %v1490 = vunpack.c.l.b16 %v1352
        %v1491 = vunpack.c.h.b16 %v1352
        %v1492 = vunpack.c.l.b16 %v1353
        %v1493 = vunpack.c.h.b16 %v1353
        %v1494 = vunpack.c.l.b16 %v1354
        %v1495 = vunpack.c.h.b16 %v1354
        %v1496 = vunpack.c.l.b16 %v1355
        %v1497 = vunpack.c.h.b16 %v1355
        %v1498 = vunpack.c.l.b16 %v1356
        %v1499 = vunpack.c.h.b16 %v1356
        %v1500 = vunpack.c.l.b16 %v1357
        %v1501 = vunpack.c.h.b16 %v1357
        %v1502 = vunpack.c.l.b16 %v1358
        %v1503 = vunpack.c.h.b16 %v1358
        %v1504 = vunpack.c.l.b16 %v1359
        %v1505 = vunpack.c.h.b16 %v1359
        %v1506 = vunpack.c.l.b16 %v1360
        %v1507 = vunpack.c.h.b16 %v1360
        %v1508 = vunpack.c.l.b16 %v1361
        %v1509 = vunpack.c.h.b16 %v1361
        %v1510 = vunpack.c.l.b16 %v1362
        %v1511 = vunpack.c.h.b16 %v1362
        %v1512 = vunpack.c.l.b16 %v1363
        %v1513 = vunpack.c.h.b16 %v1363
        %v1514 = vunpack.c.l.b16 %v1364
        %v1515 = vunpack.c.h.b16 %v1364
        %v1516 = vunpack.c.l.b16 %v1365
        %v1517 = vunpack.c.h.b16 %v1365
        %v1518 = vunpack.c.l.b16 %v1366
        %v1519 = vunpack.c.h.b16 %v1366
        %v1520 = vunpack.c.l.b16 %v1367
        %v1521 = vunpack.c.h.b16 %v1367
        %v1522 = vunpack.c.l.b16 %v1368
        %v1523 = vunpack.c.h.b16 %v1368
        %v1524 = vunpack.c.l.b16 %v1369
        %v1525 = vunpack.c.h.b16 %v1369
        %v1526 = vunpack.c.l.b16 %v1370
        %v1527 = vunpack.c.h.b16 %v1370
        %v1528 = vunpack.c.l.b16 %v1371
        %v1529 = vunpack.c.h.b16 %v1371
        %v1530 = vunpack.c.l.b16 %v1372
        %v1531 = vunpack.c.h.b16 %v1372
        %v1532 = vunpack.c.l.b16 %v1373
        %v1533 = vunpack.c.h.b16 %v1373
        %v1534 = vunpack.c.l.b16 %v1374
        %v1535 = vunpack.c.h.b16 %v1374
        %v1536 = vunpack.c.l.b16 %v1375
        %v1537 = vunpack.c.h.b16 %v1375
        %v1538 = vunpack.c.l.b16 %v1376
        %v1539 = vunpack.c.h.b16 %v1376
        %v1540 = vunpack.c.l.b16 %v1377
        %v1541 = vunpack.c.h.b16 %v1377
        %v1542 = vunpack.c.l.b16 %v1378
        %v1543 = vunpack.c.h.b16 %v1378
        %v1544 = vunpack.c.l.b16 %v1379
        %v1545 = vunpack.c.h.b16 %v1379
        %v1546 = vunpack.c.l.b16 %v1380
        %v1547 = vunpack.c.h.b16 %v1380
        %v1548 = vunpack.c.l.b16 %v1381
        %v1549 = vunpack.c.h.b16 %v1381
        %v1550 = vunpack.c.l.b16 %v1382
        %v1551 = vunpack.c.h.b16 %v1382
        %v1552 = vunpack.c.l.b16 %v1383
        %v1553 = vunpack.c.h.b16 %v1383
        %v1554 = vunpack.c.l.b16 %v1384
        %v1555 = vunpack.c.h.b16 %v1384
        %v1556 = vunpack.c.l.b16 %v1385
        %v1557 = vunpack.c.h.b16 %v1385
        %v1558 = vunpack.c.l.b16 %v1386
        %v1559 = vunpack.c.h.b16 %v1386
        %v1560 = vunpack.c.l.b16 %v1387
        %v1561 = vunpack.c.h.b16 %v1387
        %v1562 = vunpack.c.l.b16 %v1388
        %v1563 = vunpack.c.h.b16 %v1388
        %v1564 = vunpack.c.l.b16 %v1389
        %v1565 = vunpack.c.h.b16 %v1389
        %v1566 = vunpack.c.l.b16 %v1390
        %v1567 = vunpack.c.h.b16 %v1390
        %v1568 = vunpack.c.l.b16 %v1391
        %v1569 = vunpack.c.h.b16 %v1391
        %v1570 = vunpack.c.l.b16 %v1392
        %v1571 = vunpack.c.h.b16 %v1392
        %v1572 = vunpack.c.l.b16 %v1393
        %v1573 = vunpack.c.h.b16 %v1393
        %v1574 = vunpack.c.l.b16 %v1394
        %v1575 = vunpack.c.h.b16 %v1394
        %v1576 = vunpack.c.l.b16 %v1395
        %v1577 = vunpack.c.h.b16 %v1395
        %v1578 = vunpack.c.l.b16 %v1396
        %v1579 = vunpack.c.h.b16 %v1396
        %v1580 = vunpack.c.l.b16 %v1397
        %v1581 = vunpack.c.h.b16 %v1397
        %v1582 = vunpack.c.l.b16 %v1398
        %v1583 = vunpack.c.h.b16 %v1398
        %v1584 = vunpack.c.l.b16 %v1399
        %v1585 = vunpack.c.h.b16 %v1399
        %v1586 = vunpack.c.l.b16 %v1400
        %v1587 = vunpack.c.h.b16 %v1400
        %v1588 = vunpack.c.l.b16 %v1401
        %v1589 = vunpack.c.h.b16 %v1401
        %v1590 = vunpack.c.l.b16 %v1402
        %v1591 = vunpack.c.h.b16 %v1402
        %v1592 = vunpack.c.l.b16 %v1403
        %v1593 = vunpack.c.h.b16 %v1403
        %v1594 = vunpack.c.l.b16 %v1404
        %v1595 = vunpack.c.h.b16 %v1404
        %v1596 = vunpack.c.l.b16 %v1405
        %v1597 = vunpack.c.h.b16 %v1405
        %v1598 = vpack.c.b16 %v1472, %v1470
        %v1599 = vpack.c.b16 %v1473, %v1471
        %v1600 = vpack.c.b16 %v1476, %v1474
        %v1601 = vpack.c.b16 %v1477, %v1475
        %v1602 = vpack.c.b16 %v1480, %v1478
        %v1603 = vpack.c.b16 %v1481, %v1479
        %v1604 = vpack.c.b16 %v1484, %v1482
        %v1605 = vpack.c.b16 %v1485, %v1483
        %v1606 = vpack.c.b16 %v1488, %v1486
        %v1607 = vpack.c.b16 %v1489, %v1487
        %v1608 = vpack.c.b16 %v1492, %v1490
        %v1609 = vpack.c.b16 %v1493, %v1491
        %v1610 = vpack.c.b16 %v1496, %v1494
        %v1611 = vpack.c.b16 %v1497, %v1495
        %v1612 = vpack.c.b16 %v1500, %v1498
        %v1613 = vpack.c.b16 %v1501, %v1499
        %v1614 = vpack.c.b16 %v1504, %v1502
        %v1615 = vpack.c.b16 %v1505, %v1503
        %v1616 = vpack.c.b16 %v1508, %v1506
        %v1617 = vpack.c.b16 %v1509, %v1507
        %v1618 = vpack.c.b16 %v1512, %v1510
        %v1619 = vpack.c.b16 %v1513, %v1511
        %v1620 = vpack.c.b16 %v1516, %v1514
        %v1621 = vpack.c.b16 %v1517, %v1515
        %v1622 = vpack.c.b16 %v1520, %v1518
        %v1623 = vpack.c.b16 %v1521, %v1519
        %v1624 = vpack.c.b16 %v1524, %v1522
        %v1625 = vpack.c.b16 %v1525, %v1523
        %v1626 = vpack.c.b16 %v1528, %v1526
        %v1627 = vpack.c.b16 %v1529, %v1527
        %v1628 = vpack.c.b16 %v1532, %v1530
        %v1629 = vpack.c.b16 %v1533, %v1531
        %v1630 = vpack.c.b16 %v1536, %v1534
        %v1631 = vpack.c.b16 %v1537, %v1535
        %v1632 = vpack.c.b16 %v1540, %v1538
        %v1633 = vpack.c.b16 %v1541, %v1539
        %v1634 = vpack.c.b16 %v1544, %v1542
        %v1635 = vpack.c.b16 %v1545, %v1543
        %v1636 = vpack.c.b16 %v1548, %v1546
        %v1637 = vpack.c.b16 %v1549, %v1547
        %v1638 = vpack.c.b16 %v1552, %v1550
        %v1639 = vpack.c.b16 %v1553, %v1551
        %v1640 = vpack.c.b16 %v1556, %v1554
        %v1641 = vpack.c.b16 %v1557, %v1555
        %v1642 = vpack.c.b16 %v1560, %v1558
        %v1643 = vpack.c.b16 %v1561, %v1559
        %v1644 = vpack.c.b16 %v1564, %v1562
        %v1645 = vpack.c.b16 %v1565, %v1563
        %v1646 = vpack.c.b16 %v1568, %v1566
        %v1647 = vpack.c.b16 %v1569, %v1567
        %v1648 = vpack.c.b16 %v1572, %v1570
        %v1649 = vpack.c.b16 %v1573, %v1571
        %v1650 = vpack.c.b16 %v1576, %v1574
        %v1651 = vpack.c.b16 %v1577, %v1575
        %v1652 = vpack.c.b16 %v1580, %v1578
        %v1653 = vpack.c.b16 %v1581, %v1579
        %v1654 = vpack.c.b16 %v1584, %v1582
        %v1655 = vpack.c.b16 %v1585, %v1583
        %v1656 = vpack.c.b16 %v1588, %v1586
        %v1657 = vpack.c.b16 %v1589, %v1587
        %v1658 = vpack.c.b16 %v1592, %v1590
        %v1659 = vpack.c.b16 %v1593, %v1591
        %v1660 = vpack.c.b16 %v1596, %v1594
        %v1661 = vpack.c.b16 %v1597, %v1595
        %1726 = vmatpush.bf16.msra.mxu0 %v1612
        %1727 = vmatpush.bf16.msra.mxu0 %v1610
        %1728 = vmatpush.bf16.msra.mxu0 %v1608
        %1729 = vmatpush.bf16.msra.mxu0 %v1606
        %1730 = vmatpush.bf16.msra.mxu0 %v1604
        %1731 = vmatpush.bf16.msra.mxu0 %v1602
        %1732 = vmatpush.bf16.msra.mxu0 %v1600
        %1733 = vmatpush.bf16.msra.mxu0 %v1598
        %1734 = vmatmul.bf16.gmra.mxu0 %v1338
        %v1735 = vpop.f32.mrf.mxu0
        %v1736 = vadd.f32 0.0, %v1735
        %v1737 = vpop.f32.mrf.mxu0
        %1738 = vdwg.mxu0
        %1739 = vmatpush.bf16.msra.mxu0 %v1628
        %1740 = vmatpush.bf16.msra.mxu0 %v1626
        %1741 = vmatpush.bf16.msra.mxu0 %v1624
        %1742 = vmatpush.bf16.msra.mxu0 %v1622
        %1743 = vmatpush.bf16.msra.mxu0 %v1620
        %1744 = vmatpush.bf16.msra.mxu0 %v1618
        %1745 = vmatpush.bf16.msra.mxu0 %v1616
        %1746 = vmatpush.bf16.msra.mxu0 %v1614
        %1747 = vmatmul.bf16.gmra.mxu0 %v1339
        %v1748 = vpop.f32.mrf.mxu0
        %v1749 = vadd.f32 %v1736, %v1748
        %v1750 = vpop.f32.mrf.mxu0
        %1751 = vdwg.mxu0
        %1752 = vmatpush.bf16.msra.mxu0 %v1644
        %1753 = vmatpush.bf16.msra.mxu0 %v1642
        %1754 = vmatpush.bf16.msra.mxu0 %v1640
        %1755 = vmatpush.bf16.msra.mxu0 %v1638
        %1756 = vmatpush.bf16.msra.mxu0 %v1636
        %1757 = vmatpush.bf16.msra.mxu0 %v1634
        %1758 = vmatpush.bf16.msra.mxu0 %v1632
        %1759 = vmatpush.bf16.msra.mxu0 %v1630
        %1760 = vmatmul.bf16.gmra.mxu0 %v1340
        %v1761 = vpop.f32.mrf.mxu0
        %v1762 = vadd.f32 %v1749, %v1761
        %v1763 = vpop.f32.mrf.mxu0
        %1764 = vdwg.mxu0
        %1765 = vmatpush.bf16.msra.mxu0 %v1660
        %1766 = vmatpush.bf16.msra.mxu0 %v1658
        %1767 = vmatpush.bf16.msra.mxu0 %v1656
        %1768 = vmatpush.bf16.msra.mxu0 %v1654
        %1769 = vmatpush.bf16.msra.mxu0 %v1652
        %1770 = vmatpush.bf16.msra.mxu0 %v1650
        %1771 = vmatpush.bf16.msra.mxu0 %v1648
        %1772 = vmatpush.bf16.msra.mxu0 %v1646
        %1773 = vmatmul.bf16.gmra.mxu0 %v1341
        %v1774 = vpop.f32.mrf.mxu0
        %v1775 = vadd.f32 %v1762, %v1774
        %v1776 = vpop.f32.mrf.mxu0
        %1777 = vdwg.mxu0
        %1778 = vmatpush.bf16.msra.mxu0 %v1613
        %1779 = vmatpush.bf16.msra.mxu0 %v1611
        %1780 = vmatpush.bf16.msra.mxu0 %v1609
        %1781 = vmatpush.bf16.msra.mxu0 %v1607
        %1782 = vmatpush.bf16.msra.mxu0 %v1605
        %1783 = vmatpush.bf16.msra.mxu0 %v1603
        %1784 = vmatpush.bf16.msra.mxu0 %v1601
        %1785 = vmatpush.bf16.msra.mxu0 %v1599
        %1786 = vmatmul.bf16.gmra.mxu0 %v1338
        %v1787 = vpop.f32.mrf.mxu0
        %v1788 = vadd.f32 0.0, %v1787
        %v1789 = vpop.f32.mrf.mxu0
        %1790 = vdwg.mxu0
        %1791 = vmatpush.bf16.msra.mxu0 %v1629
        %1792 = vmatpush.bf16.msra.mxu0 %v1627
        %1793 = vmatpush.bf16.msra.mxu0 %v1625
        %1794 = vmatpush.bf16.msra.mxu0 %v1623
        %1795 = vmatpush.bf16.msra.mxu0 %v1621
        %1796 = vmatpush.bf16.msra.mxu0 %v1619
        %1797 = vmatpush.bf16.msra.mxu0 %v1617
        %1798 = vmatpush.bf16.msra.mxu0 %v1615
        %1799 = vmatmul.bf16.gmra.mxu0 %v1339
        %v1800 = vpop.f32.mrf.mxu0
        %v1801 = vadd.f32 %v1788, %v1800
        %v1802 = vpop.f32.mrf.mxu0
        %1803 = vdwg.mxu0
        %1804 = vmatpush.bf16.msra.mxu0 %v1645
        %1805 = vmatpush.bf16.msra.mxu0 %v1643
        %1806 = vmatpush.bf16.msra.mxu0 %v1641
        %1807 = vmatpush.bf16.msra.mxu0 %v1639
        %1808 = vmatpush.bf16.msra.mxu0 %v1637
        %1809 = vmatpush.bf16.msra.mxu0 %v1635
        %1810 = vmatpush.bf16.msra.mxu0 %v1633
        %1811 = vmatpush.bf16.msra.mxu0 %v1631
        %1812 = vmatmul.bf16.gmra.mxu0 %v1340
        %v1813 = vpop.f32.mrf.mxu0
        %v1814 = vadd.f32 %v1801, %v1813
        %v1815 = vpop.f32.mrf.mxu0
        %1816 = vdwg.mxu0
        %1817 = vmatpush.bf16.msra.mxu0 %v1661
        %1818 = vmatpush.bf16.msra.mxu0 %v1659
        %1819 = vmatpush.bf16.msra.mxu0 %v1657
        %1820 = vmatpush.bf16.msra.mxu0 %v1655
        %1821 = vmatpush.bf16.msra.mxu0 %v1653
        %1822 = vmatpush.bf16.msra.mxu0 %v1651
        %1823 = vmatpush.bf16.msra.mxu0 %v1649
        %1824 = vmatpush.bf16.msra.mxu0 %v1647
        %1825 = vmatmul.bf16.gmra.mxu0 %v1341
        %v1826 = vpop.f32.mrf.mxu0
        %v1827 = vadd.f32 %v1814, %v1826
        %v1828 = vpop.f32.mrf.mxu0
        %1829 = vdwg.mxu0
        %v1830 = vadd.f32 %v1336, %v1775
        %v1831 = vadd.f32 %v1337, %v1827
        %1832 = vst [vmem:[#allocation2] sm:$0xff] %v1830
        %1833 = vst [vmem:[#allocation2 + $0x8] sm:$0xff] %v1831
        %p1834 = scmp.eq.s32.totalorder %s24, 1
        // Predicated region
        $region49: #{_qwen_mlp_call.1} parent=31 // pred_check
          %p1835 = pneg %p1834
        $region50: #{_qwen_mlp_call.1} parent=31 // pred_check_branch
          %1837 = sbr.rel (%p1835) target = $region52
        $region51: #{_qwen_mlp_call.1} parent=31 // pred_region
          %v1838 = vld [vmem:[#allocation2] sm:$0xff]
          %v1839 = vld [vmem:[#allocation2 + $0x8] sm:$0xff]
          %v1840 = vpack.c.bf16 %v1839, %v1838
          %1841 = vst [vmem:[#allocation9] sm:$0xff] %v1840
        $region52: #{_qwen_mlp_call.1} parent=31 // pred_fallthru
          _
        // Predicated region
        $region53: #{_qwen_mlp_call.1} parent=31 // pred_check
          %p1842 = pneg %p127
        $region54: #{_qwen_mlp_call.1} parent=31 // pred_check_branch
          %1844 = sbr.rel (%p1842) target = $region56
        $region55: #{_qwen_mlp_call.1} parent=31 // pred_region
          %1846 = vsyncadd [#allocation5], 0
          %s1847 = smul.addr %s23, 2
          %s1848 = smul.addr %s1847, 4
          %s1849 = scalar_lea.hbm %s3, %s1848
          %s1851 = sshll.u32 [#allocation9], 4
          %s1852 = int_to_ptr.vmem [resolvable:$true] %s1851
          %s1853 = sshll.u32 %s1849, 4
          %s1854 = int_to_ptr.hbm [resolvable:$true] %s1853
          %1856 = dma.vmem_to_hbm [thread:$0]  %s1852, 128, %s1854, [#allocation5]
        $region56: #{_qwen_mlp_call.1} parent=31 // pred_fallthru
          _
        // Predicated region
        $region57: #{_qwen_mlp_call.1} parent=31 // pred_check
          %p1857 = pneg %p127
        $region58: #{_qwen_mlp_call.1} parent=31 // pred_check_branch
          %1859 = sbr.rel (%p1857) target = $region60
        $region59: #{_qwen_mlp_call.1} parent=31 // pred_region
          %1861 = dma.done [#allocation5], 128
        $region60: #{_qwen_mlp_call.1} parent=31 // pred_fallthru
          _
      $region32: #{_qwen_mlp_call.1} parent=5 // pred_fallthru
        _
      %p1862 = scmp.le.s32.totalorder 2, %s14
      // Predicated region
      $region61: #{_qwen_mlp_call.1} parent=5 // pred_check
        %p1863 = pneg %p1862
      $region62: #{_qwen_mlp_call.1} parent=5 // pred_check_branch
        %1865 = sbr.rel (%p1863) target = $region64
      $region63: #{_qwen_mlp_call.1} parent=5 // pred_region
        %s1866 = ssub.s32 %s14, 2
      $region64: #{_qwen_mlp_call.1} parent=5 // pred_fallthru
        _
    $region6: #{_qwen_mlp_call.1} parent=1 // loop_footer
      %s18 = sadd.s32 1, %s14
    $region7: #{_qwen_mlp_call.1} parent=1 // loop_footer_branch
      %13 = sbr.rel target = $region3
    $region8: #{_qwen_mlp_call.1} parent=1 // loop_exit
      _
    %1867 = vsyncpa [#allocation4], 1
    %s1868 = scalar_lea.sflag [#allocation4], 1
    %1869 = vsyncpa %s1868, 1
    %1870 = vsyncpa [#allocation7], 1
    %s1871 = scalar_lea.sflag [#allocation7], 1
    %1872 = vsyncpa %s1871, 1
    %1873 = vsyncpa [#allocation5], 1
    %s1874 = scalar_lea.sflag [#allocation5], 1
    %1875 = vsyncpa %s1874, 1

</llo_original>
